<compile_context>
chip_gen: v5e
topology: v5e:2x2
jax: 0.10.0
libtpu: 0.0.40
codegen_flags: <defaults>
</compile_context>

<pallas_src>
import jax
import jax.numpy as jnp
from jax.experimental import pallas as pl
from jax.experimental.pallas import tpu as pltpu

NEG_INF = -1e30        # finite mask value: avoids inf-inf NaNs in the max chain
LEAKY_SLOPE = 0.01     # F.leaky_relu default negative slope


def _round_up(x, m):
    return (x + m - 1) // m * m


def _pick_tiles(kind, n):
    """Per-generation (tile_dst, tile_src) choice."""
    n128 = max(128, _round_up(n, 128))
    if "v5 lite" in kind or "v5e" in kind or "v5lite" in kind:
        # 128 matches v5e's 4x128^2 MXU; wide src tiles -> fewer, larger
        # HBM-bound adj DMAs and 4x less per-grid-step overhead.
        td, ts = 128, 512
    elif "v7" in kind or "v6" in kind:
        # Fill the 256-wide MXU, quarter the grid-step count.
        td, ts = 256, 256
    else:
        # v4 / v5p / unknown: safe default.
        td, ts = 128, 256
    ts = min(ts, n128)
    td = min(td, n128)
    if "v7" in kind:
        # v7x has 2 TensorCores; the "parallel" dst axis is what gets sharded
        # across them, so keep at least 2 dst tiles when there is enough work.
        while td > 128 and n128 // td < 2:
            td //= 2
    return td, ts


def _gat_step(si, e_dst_ref, e_src_ref, get_z_tile, adj_ref, out_ref,
              m_scr, l_scr, acc_scr):
    """One (dst_tile, src_tile) step of the flash-style masked softmax."""

    @pl.when(si == 0)
    def _init():
        m_scr[...] = jnp.full_like(m_scr, -jnp.inf)
        l_scr[...] = jnp.zeros_like(l_scr)
        acc_scr[...] = jnp.zeros_like(acc_scr)

    # Edge logits for this (dst, src) tile.  leaky_relu = one maximum, then a
    # single mask select on the int8 adjacency tile.
    mask = adj_ref[...] != 0                                    # [TD, TS]
    e = e_dst_ref[...] + e_src_ref[...]                         # [TD,1]+[1,TS]
    e = jnp.maximum(e, LEAKY_SLOPE * e)                         # leaky_relu
    e = jnp.where(mask, e, NEG_INF)

    # Online (flash-style) masked softmax over incoming edges (src axis).
    m_new = jnp.maximum(m_scr[...], jnp.max(e, axis=1, keepdims=True))  # [TD,1]
    corr = jnp.exp(m_scr[...] - m_new)                          # [TD,1]
    # Second select keeps p exactly 0 for non-edges even when a whole row is
    # masked (zero-in-degree / padded rows) -> 0 output via the denom guard.
    p = jnp.where(mask, jnp.exp(e - m_new), 0.0)                # [TD,TS]
    l_scr[...] = corr * l_scr[...] + jnp.sum(p, axis=1, keepdims=True)
    acc_scr[...] = corr * acc_scr[...] + jnp.dot(
        p.astype(jnp.bfloat16), get_z_tile(),
        preferred_element_type=jnp.float32)                     # [TD, P]
    m_scr[...] = m_new

    @pl.when(si == pl.num_programs(1) - 1)
    def _finalize():
        # Normalize AFTER the aggregation matmul: [TD,1] approx reciprocal
        # (EUP slot) broadcast over the lane axis, not a [TD,TS] alpha matrix.
        # Guard gives 0 output for nodes with no incoming edges / padding.
        denom = jnp.maximum(l_scr[...], 1e-30)
        out_ref[...] = (acc_scr[...] * pl.reciprocal(denom, approx=True)
                        ).astype(out_ref.dtype)


def _make_resident_kernel(tile_src):
    """z precomputed in the wrapper, resident in VMEM (single DMA)."""
    def kernel(e_dst_ref, e_src_ref, z_ref, adj_ref, out_ref,
               m_scr, l_scr, acc_scr):
        si = pl.program_id(1)

        def z_tile():
            start = pl.multiple_of(si * tile_src, tile_src)
            return z_ref[pl.ds(start, tile_src), :]             # [TS, P] bf16

        _gat_step(si, e_dst_ref, e_src_ref, z_tile, adj_ref, out_ref,
                  m_scr, l_scr, acc_scr)
    return kernel


def _recompute_kernel(e_dst_ref, e_src_ref, h_ref, wz_ref, adj_ref, out_ref,
                      m_scr, l_scr, acc_scr):
    """Fallback for very large N: stream h tiles, recompute z per step."""
    si = pl.program_id(1)

    def z_tile():
        z = jnp.dot(h_ref[...], wz_ref[...],
                    preferred_element_type=jnp.float32)         # [TS, P]
        return z.astype(jnp.bfloat16)

    _gat_step(si, e_dst_ref, e_src_ref, z_tile, adj_ref, out_ref,
              m_scr, l_scr, acc_scr)


def gat_layer(h, w_fc, w_attn, adj, *, tile_dst=None, tile_src=None):
    """
    h      : [N, in_dim]         node features
    w_fc   : [out_dim, in_dim]   (PyTorch nn.Linear weight layout, no bias)
    w_attn : [1, 2*out_dim]      (attn_fc weight, no bias)
    adj    : [N, N], adj[dst, src] != 0 iff edge src -> dst
    returns: [N, out_dim] float32
    """
    N, in_dim = h.shape
    out_dim = w_fc.shape[0]

    kind = getattr(jax.devices()[0], "device_kind", "").lower()
    td_auto, ts_auto = _pick_tiles(kind, N)
    tile_dst = tile_dst or td_auto
    tile_src = tile_src or ts_auto

    P = _round_up(out_dim, 128)            # lane-dense padded feature width
    DP = _round_up(N, tile_dst)            # padded dst (sublane) extent
    SP = _round_up(N, tile_src)            # padded src (lane) extent

    h32 = jnp.asarray(h, jnp.float32)
    w_fc_t = jnp.asarray(w_fc, jnp.float32).T                # [in_dim, out_dim]
    w_attn32 = jnp.asarray(w_attn, jnp.float32)
    a_src = w_attn32[0, :out_dim]                            # multiplies z_src
    a_dst = w_attn32[0, out_dim:]                            # multiplies z_dst

    # Fold the two rank-1 attention halves into per-node scalars once in the
    # wrapper (O(N*in_dim)); the kernel's hot loop has no tiny MXU ops.
    e_src_all = h32 @ (w_fc_t @ a_src)                       # [N]
    e_dst_all = h32 @ (w_fc_t @ a_dst)                       # [N]

    e_dst_pad = jnp.zeros((DP, 1), jnp.float32).at[:N, 0].set(e_dst_all)
    e_src_pad = jnp.zeros((1, SP), jnp.float32).at[0, :N].set(e_src_all)
    # Adjacency as int8 0/1: halves the dominant O(N^2) HBM stream vs bf16 and
    # avoids bf16-subnormal / negative-weight edge misclassification.
    adj_pad = jnp.zeros((DP, SP), jnp.int8).at[:N, :N].set(
        (jnp.asarray(adj) != 0).astype(jnp.int8))

    # --- VMEM budget: decide resident-z vs streaming-h recompute -----------
    # v7x has 64 MiB VMEM per TensorCore; v5e/v6e have 128 MiB.  Leave
    # generous headroom for the compiler's own scratch.
    vmem_budget = (40 if "v7" in kind else 96) * (1 << 20)
    z_resident_bytes = 2 * SP * P * 2          # conservatively assume 2 bufs
    step_bytes = (2 * tile_dst * tile_src * 1          # adj int8, dbl-buffered
                  + 2 * tile_dst * P * 2               # bf16 out tile, dbl-buf
                  + 2 * (tile_dst + tile_src) * 4      # e_dst / e_src
                  + tile_dst * P * 4 + 8 * tile_dst)   # f32 accum + m/l scratch
    use_resident_z = (z_resident_bytes + step_bytes) <= vmem_budget

    grid = (DP // tile_dst, SP // tile_src)
    scratch = [
        pltpu.VMEM((tile_dst, 1), jnp.float32),   # running max
        pltpu.VMEM((tile_dst, 1), jnp.float32),   # running sum
        pltpu.VMEM((tile_dst, P), jnp.float32),   # output accumulator
    ]
    # bf16 padded output: halves the O(N*P) writeback; accuracy is already
    # bf16-limited by the MXU operands.  Wrapper casts back to f32.
    out_shape = jax.ShapeDtypeStruct((DP, P), jnp.bfloat16)
    out_spec = pl.BlockSpec((tile_dst, P), lambda di, si: (di, 0))
    compiler_params = pltpu.CompilerParams(
        # dst tiles are independent (megacore-split on v7x); the src axis is
        # the online-softmax reduction and must run in order.
        dimension_semantics=("parallel", "arbitrary"),
        vmem_limit_bytes=vmem_budget,
    )

    if use_resident_z:
        # Precompute z once in the wrapper; it stays resident in VMEM for the
        # whole grid (constant index_map -> fetched by a single DMA).
        z_pad = jnp.zeros((SP, P), jnp.bfloat16).at[:N, :out_dim].set(
            (h32 @ w_fc_t).astype(jnp.bfloat16))
        kernel = _make_resident_kernel(tile_src)
        in_specs = [
            pl.BlockSpec((tile_dst, 1), lambda di, si: (di, 0)),          # e_dst
            pl.BlockSpec((1, tile_src), lambda di, si: (0, si)),          # e_src
            pl.BlockSpec((SP, P), lambda di, si: (0, 0)),                 # z (resident)
            pl.BlockSpec((tile_dst, tile_src), lambda di, si: (di, si)),  # adj
        ]
        args = (e_dst_pad, e_src_pad, z_pad, adj_pad)
    else:
        # Very large N: z does not fit VMEM -> stream h tiles and recompute z
        # per dst tile (cheaper than re-streaming z from HBM per dst tile).
        h_pad = jnp.zeros((SP, in_dim), jnp.bfloat16).at[:N].set(
            h32.astype(jnp.bfloat16))
        wz_pad = jnp.zeros((in_dim, P), jnp.bfloat16).at[:, :out_dim].set(
            w_fc_t.astype(jnp.bfloat16))
        kernel = _recompute_kernel
        in_specs = [
            pl.BlockSpec((tile_dst, 1), lambda di, si: (di, 0)),          # e_dst
            pl.BlockSpec((1, tile_src), lambda di, si: (0, si)),          # e_src
            pl.BlockSpec((tile_src, in_dim), lambda di, si: (si, 0)),     # h
            pl.BlockSpec((in_dim, P), lambda di, si: (0, 0)),             # W_fc^T
            pl.BlockSpec((tile_dst, tile_src), lambda di, si: (di, si)),  # adj
        ]
        args = (e_dst_pad, e_src_pad, h_pad, wz_pad, adj_pad)

    out_padded = pl.pallas_call(
        kernel,
        out_shape=out_shape,
        grid_spec=pltpu.PrefetchScalarGridSpec(
            num_scalar_prefetch=0,
            grid=grid,
            in_specs=in_specs,
            out_specs=out_spec,
            scratch_shapes=scratch),
        compiler_params=compiler_params,
    )(*args)

    return out_padded[:N, :out_dim].astype(jnp.float32)


def _reference(h, w_fc, w_attn, adj):
    # Pure-f32 JAX reference mirroring the DGL message-passing semantics.
    out_dim = w_fc.shape[0]
    z = h @ w_fc.T
    a_src = w_attn[0, :out_dim]
    a_dst = w_attn[0, out_dim:]
    e = (z @ a_dst)[:, None] + (z @ a_src)[None, :]            # e[dst, src]
    e = jnp.where(e > 0, e, 0.01 * e)
    e = jnp.where(adj != 0, e, -1e30)
    e = e - jnp.max(e, axis=1, keepdims=True)
    p = jnp.where(adj != 0, jnp.exp(e), 0.0)
    alpha = p / jnp.sum(p, axis=1, keepdims=True)
    return alpha @ z


if __name__ == "__main__":
    # N=200: padded to 256 along both axes; exercises the dst-parallel axis
    # (2 dst tiles on v5e/v7x), the online softmax, and the padding path.
    N, in_dim, out_dim = 200, 32, 16

    key = jax.random.PRNGKey(0)
    k_h, k_fc, k_attn = jax.random.split(key, 3)

    # Deterministic xavier_normal_(gain=sqrt(2)) style init.
    gain = jnp.sqrt(2.0)
    std_fc = gain * jnp.sqrt(2.0 / (in_dim + out_dim))
    std_attn = gain * jnp.sqrt(2.0 / (2 * out_dim + 1))
    w_fc = std_fc * jax.random.normal(k_fc, (out_dim, in_dim), jnp.float32)
    w_attn = std_attn * jax.random.normal(k_attn, (1, 2 * out_dim), jnp.float32)

    h = jax.random.normal(k_h, (N, in_dim), jnp.float32)

    # Deterministic graph: self-loops + ring (edge i -> (i+1) % N), so every
    # node has at least one incoming edge.
    eye = jnp.eye(N, dtype=jnp.float32)
    ring = jnp.roll(eye, shift=1, axis=0)
    adj = jnp.clip(eye + ring, 0.0, 1.0)

    out = gat_layer(h, w_fc, w_attn, adj)
    out = jax.block_until_ready(out)

    ref = _reference(h, w_fc, w_attn, adj)
    assert out.shape == (N, out_dim)
    # Tolerance accounts for bf16 MXU operands / bf16 output (f32 accumulation)
    # and the approx EUP reciprocal vs. the pure-f32 reference.
    assert jnp.allclose(out, ref, atol=5e-2, rtol=5e-2), float(
        jnp.max(jnp.abs(out - ref)))

    print("KERNEL_OK")
</pallas_src>

<mosaic_0001>
module attributes {stable_mosaic.version = 11 : i64} {
  func.func @kernel(%arg0: i32, %arg1: i32, %arg2: memref<128x1xf32, #tpu.memory_space<vmem>>, %arg3: memref<1x256xf32, #tpu.memory_space<vmem>>, %arg4: memref<256x128xbf16, #tpu.memory_space<vmem>>, %arg5: memref<128x256xi8, #tpu.memory_space<vmem>>, %arg6: memref<128x128xbf16, #tpu.memory_space<vmem>>, %arg7: memref<128x1xf32, #tpu.memory_space<vmem>>, %arg8: memref<128x1xf32, #tpu.memory_space<vmem>>, %arg9: memref<128x128xf32, #tpu.memory_space<vmem>>) attributes {dimension_semantics = [#tpu.dimension_semantics<parallel>, #tpu.dimension_semantics<arbitrary>], iteration_bounds = array<i64: 2, 1>, scalar_prefetch = 0 : i64, scratch_operands = 3 : i64, tpu.core_type = #tpu.core_type<tc>, window_params = [{transform_indices = @transform_0, window_bounds = array<i64: 128, 1>}, {transform_indices = @transform_1, window_bounds = array<i64: 1, 256>}, {pipeline_mode = #tpu.pipeline_mode<synchronous>, transform_indices = @transform_2, window_bounds = array<i64: 256, 128>}, {transform_indices = @transform_3, window_bounds = array<i64: 128, 256>}, {transform_indices = @transform_4, window_bounds = array<i64: 128, 128>}]} {
    %c0_i32 = arith.constant 0 : i32
    %0 = arith.cmpi eq, %arg1, %c0_i32 : i32
    %1 = arith.extui %0 : i1 to i32
    %c0_i32_0 = arith.constant 0 : i32
    %2 = arith.cmpi ne, %1, %c0_i32_0 : i32
    scf.if %2 {
      %cst_28 = arith.constant 0xFF800000 : f32
      %49 = vector.broadcast %cst_28 : f32 to vector<128x1xf32>
      %c0_29 = arith.constant 0 : index
      %c0_30 = arith.constant 0 : index
      %50 = vector.load %arg7[%c0_29, %c0_30] : memref<128x1xf32, #tpu.memory_space<vmem>>, vector<128x1xf32>
      tpu.vector_store %arg7[%c0_29, %c0_30], %49 {strides = array<i32>} : memref<128x1xf32, #tpu.memory_space<vmem>>, vector<128x1xf32>,
      %cst_31 = arith.constant 0.000000e+00 : f32
      %51 = vector.broadcast %cst_31 : f32 to vector<128x1xf32>
      %c0_32 = arith.constant 0 : index
      %c0_33 = arith.constant 0 : index
      %52 = vector.load %arg8[%c0_32, %c0_33] : memref<128x1xf32, #tpu.memory_space<vmem>>, vector<128x1xf32>
      tpu.vector_store %arg8[%c0_32, %c0_33], %51 {strides = array<i32>} : memref<128x1xf32, #tpu.memory_space<vmem>>, vector<128x1xf32>,
      %cst_34 = arith.constant 0.000000e+00 : f32
      %53 = vector.broadcast %cst_34 : f32 to vector<128x128xf32>
      %c0_35 = arith.constant 0 : index
      %c0_36 = arith.constant 0 : index
      %54 = vector.load %arg9[%c0_35, %c0_36] : memref<128x128xf32, #tpu.memory_space<vmem>>, vector<128x128xf32>
      tpu.vector_store %arg9[%c0_35, %c0_36], %53 {strides = array<i32>} : memref<128x128xf32, #tpu.memory_space<vmem>>, vector<128x128xf32>,
    } else {
    }
    %c0 = arith.constant 0 : index
    %c0_1 = arith.constant 0 : index
    %3 = vector.load %arg5[%c0, %c0_1] : memref<128x256xi8, #tpu.memory_space<vmem>>, vector<128x256xi8>
    %c0_i8 = arith.constant 0 : i8
    %4 = vector.broadcast %c0_i8 : i8 to vector<128x256xi8>
    %5 = arith.cmpi ne, %3, %4 : vector<128x256xi8>
    %c0_2 = arith.constant 0 : index
    %c0_3 = arith.constant 0 : index
    %6 = vector.load %arg2[%c0_2, %c0_3] : memref<128x1xf32, #tpu.memory_space<vmem>>, vector<128x1xf32>
    %c0_4 = arith.constant 0 : index
    %c0_5 = arith.constant 0 : index
    %7 = vector.load %arg3[%c0_4, %c0_5] : memref<1x256xf32, #tpu.memory_space<vmem>>, vector<1x256xf32>
    %8 = vector.broadcast %6 : vector<128x1xf32> to vector<128x256xf32>
    %9 = vector.broadcast %7 : vector<1x256xf32> to vector<128x256xf32>
    %10 = arith.addf %8, %9 : vector<128x256xf32>
    %cst = arith.constant 0.00999999977 : f32
    %11 = vector.broadcast %cst : f32 to vector<128x256xf32>
    %12 = arith.mulf %11, %10 : vector<128x256xf32>
    %13 = arith.maximumf %10, %12 : vector<128x256xf32>
    %cst_6 = arith.constant -1.000000e+30 : f32
    %14 = vector.broadcast %cst_6 : f32 to vector<128x256xf32>
    %15 = arith.select %5, %13, %14 : vector<128x256xi1>, vector<128x256xf32>
    %c0_7 = arith.constant 0 : index
    %c0_8 = arith.constant 0 : index
    %16 = vector.load %arg7[%c0_7, %c0_8] : memref<128x1xf32, #tpu.memory_space<vmem>>, vector<128x1xf32>
    %cst_9 = arith.constant dense<0xFF800000> : vector<128xf32>
    %17 = vector.multi_reduction <maximumf>, %15, %cst_9 [1] : vector<128x256xf32> to vector<128xf32>
    %18 = vector.shape_cast %17 : vector<128xf32> to vector<128x1xf32>
    %19 = arith.maximumf %16, %18 : vector<128x1xf32>
    %c0_10 = arith.constant 0 : index
    %c0_11 = arith.constant 0 : index
    %20 = vector.load %arg7[%c0_10, %c0_11] : memref<128x1xf32, #tpu.memory_space<vmem>>, vector<128x1xf32>
    %21 = arith.subf %20, %19 : vector<128x1xf32>
    %22 = math.exp %21 : vector<128x1xf32>
    %23 = vector.broadcast %19 : vector<128x1xf32> to vector<128x256xf32>
    %24 = arith.subf %15, %23 : vector<128x256xf32>
    %25 = math.exp %24 : vector<128x256xf32>
    %cst_12 = arith.constant 0.000000e+00 : f32
    %26 = vector.broadcast %cst_12 : f32 to vector<128x256xf32>
    %27 = arith.select %5, %25, %26 : vector<128x256xi1>, vector<128x256xf32>
    %c0_13 = arith.constant 0 : index
    %c0_14 = arith.constant 0 : index
    %28 = vector.load %arg8[%c0_13, %c0_14] : memref<128x1xf32, #tpu.memory_space<vmem>>, vector<128x1xf32>
    %29 = arith.mulf %22, %28 : vector<128x1xf32>
    %cst_15 = arith.constant dense<0.000000e+00> : vector<128xf32>
    %30 = vector.multi_reduction <add>, %27, %cst_15 [1] : vector<128x256xf32> to vector<128xf32>
    %31 = vector.shape_cast %30 : vector<128xf32> to vector<128x1xf32>
    %32 = arith.addf %29, %31 : vector<128x1xf32>
    %c0_16 = arith.constant 0 : index
    %c0_17 = arith.constant 0 : index
    %33 = vector.load %arg8[%c0_16, %c0_17] : memref<128x1xf32, #tpu.memory_space<vmem>>, vector<128x1xf32>
    tpu.vector_store %arg8[%c0_16, %c0_17], %32 {strides = array<i32>} : memref<128x1xf32, #tpu.memory_space<vmem>>, vector<128x1xf32>,
    %c0_18 = arith.constant 0 : index
    %c0_19 = arith.constant 0 : index
    %34 = vector.load %arg9[%c0_18, %c0_19] : memref<128x128xf32, #tpu.memory_space<vmem>>, vector<128x128xf32>
    %35 = vector.broadcast %22 : vector<128x1xf32> to vector<128x128xf32>
    %36 = arith.mulf %35, %34 : vector<128x128xf32>
    %37 = arith.truncf %27 : vector<128x256xf32> to vector<128x256xbf16>
    %c256_i32 = arith.constant 256 : i32
    %38 = arith.muli %arg1, %c256_i32 : i32
    %39 = tpu.assume_multiple %38, 256 : i32
    %40 = arith.index_cast %39 : i32 to index
    %c0_20 = arith.constant 0 : index
    %41 = vector.load %arg4[%40, %c0_20] : memref<256x128xbf16, #tpu.memory_space<vmem>>, vector<256x128xbf16>
    %cst_21 = arith.constant dense<0.000000e+00> : vector<128x128xf32>
    %42 = tpu.matmul %37, %41, %cst_21 {dimension_numbers = #tpu.dot_dimension_numbers<[1], [0], [0], [1], [0, 0, 1, 1], [], []>} : vector<128x256xbf16>, vector<256x128xbf16>, vector<128x128xf32> -> vector<128x128xf32>
    %43 = arith.addf %36, %42 : vector<128x128xf32>
    %c0_22 = arith.constant 0 : index
    %c0_23 = arith.constant 0 : index
    %44 = vector.load %arg9[%c0_22, %c0_23] : memref<128x128xf32, #tpu.memory_space<vmem>>, vector<128x128xf32>
    tpu.vector_store %arg9[%c0_22, %c0_23], %43 {strides = array<i32>} : memref<128x128xf32, #tpu.memory_space<vmem>>, vector<128x128xf32>,
    %c0_24 = arith.constant 0 : index
    %c0_25 = arith.constant 0 : index
    %45 = vector.load %arg7[%c0_24, %c0_25] : memref<128x1xf32, #tpu.memory_space<vmem>>, vector<128x1xf32>
    tpu.vector_store %arg7[%c0_24, %c0_25], %19 {strides = array<i32>} : memref<128x1xf32, #tpu.memory_space<vmem>>, vector<128x1xf32>,
    %c0_i32_26 = arith.constant 0 : i32
    %46 = arith.cmpi eq, %arg1, %c0_i32_26 : i32
    %47 = arith.extui %46 : i1 to i32
    %c0_i32_27 = arith.constant 0 : i32
    %48 = arith.cmpi ne, %47, %c0_i32_27 : i32
    scf.if %48 {
      %c0_28 = arith.constant 0 : index
      %c0_29 = arith.constant 0 : index
      %49 = vector.load %arg8[%c0_28, %c0_29] : memref<128x1xf32, #tpu.memory_space<vmem>>, vector<128x1xf32>
      %cst_30 = arith.constant 1.000000e-30 : f32
      %50 = vector.broadcast %cst_30 : f32 to vector<128x1xf32>
      %51 = arith.maximumf %49, %50 : vector<128x1xf32>
      %c0_31 = arith.constant 0 : index
      %c0_32 = arith.constant 0 : index
      %52 = vector.load %arg9[%c0_31, %c0_32] : memref<128x128xf32, #tpu.memory_space<vmem>>, vector<128x128xf32>
      %53 = tpu.reciprocal %51 {approx = true} : vector<128x1xf32> -> vector<128x1xf32>
      %54 = vector.broadcast %53 : vector<128x1xf32> to vector<128x128xf32>
      %55 = arith.mulf %52, %54 : vector<128x128xf32>
      %56 = arith.truncf %55 : vector<128x128xf32> to vector<128x128xbf16>
      %c0_33 = arith.constant 0 : index
      %c0_34 = arith.constant 0 : index
      %57 = vector.load %arg6[%c0_33, %c0_34] : memref<128x128xbf16, #tpu.memory_space<vmem>>, vector<128x128xbf16>
      tpu.vector_store %arg6[%c0_33, %c0_34], %56 {strides = array<i32>} : memref<128x128xbf16, #tpu.memory_space<vmem>>, vector<128x128xbf16>,
    } else {
    }
    return
  }
  func.func @transform_0(%arg0: i32, %arg1: i32) -> (i32, i32) {
    %c0_i32 = arith.constant 0 : i32
    %c0_i32_0 = arith.constant 0 : i32
    return %arg0, %c0_i32 : i32, i32
  }
  func.func @transform_1(%arg0: i32, %arg1: i32) -> (i32, i32) {
    %c0_i32 = arith.constant 0 : i32
    %c0_i32_0 = arith.constant 0 : i32
    return %c0_i32, %arg1 : i32, i32
  }
  func.func @transform_2(%arg0: i32, %arg1: i32) -> (i32, i32) {
    %c0_i32 = arith.constant 0 : i32
    %c0_i32_0 = arith.constant 0 : i32
    %c0_i32_1 = arith.constant 0 : i32
    return %c0_i32, %c0_i32_0 : i32, i32
  }
  func.func @transform_3(%arg0: i32, %arg1: i32) -> (i32, i32) {
    %c0_i32 = arith.constant 0 : i32
    return %arg0, %arg1 : i32, i32
  }
  func.func @transform_4(%arg0: i32, %arg1: i32) -> (i32, i32) {
    %c0_i32 = arith.constant 0 : i32
    %c0_i32_0 = arith.constant 0 : i32
    return %arg0, %c0_i32 : i32, i32
  }
}

</mosaic_0001>

<llo_original>
// kernel: tpu_custom_call.1
$region0: #{tpu_custom_call.1}
  #allocation0 [shape = 'u32[]', space=smem, size = 0x4, offset = 0x4, fixed_abs, tag = 'smem constant byte address 0x4 - core index']
  #allocation1 [shape = 'u32[72,128]{1,0:T(1,128)}', space=vmem, size = 0x9000, scoped, tag = 'internal scratch']
  #allocation2 [shape = 'f32[128,1]{1,0:T(8,128)}', space=vmem, size = 0x10000, scoped, tag = 'scratch operand']
  #allocation3 [shape = 'f32[128,1]{1,0:T(8,128)}', space=vmem, size = 0x10000, scoped, tag = 'scratch operand']
  #allocation4 [shape = 'f32[128,128]{1,0:T(8,128)}', space=vmem, size = 0x10000, scoped, tag = 'scratch operand']
  %s0 = inlined_call_operand.vmem [shape: f32[256,1], index: 0, kind: input, shape index: {}]
  %s1 = inlined_call_operand.vmem [shape: f32[1,256], index: 1, kind: input, shape index: {}]
  %s2 = inlined_call_operand.vmem [shape: bf16[256,128], index: 2, kind: input, shape index: {}]
  %s3 = inlined_call_operand.vmem [shape: s8[256,256], index: 3, kind: input, shape index: {}]
  %s4 = inlined_call_operand.hbm [shape: bf16[256,128], index: 4, kind: output, shape index: {}]
  %s5 = sld [smem:[#allocation0]]
  $region57: #{tpu_custom_call.1} parent=0
    _
  %s7 = ssub.s32 1, %s5
  %s8 = scalar_select 0, %s7, %s5
  $region1: #{tpu_custom_call.1} parent=0
    #allocation5 [shape = 'u8[65536]{0}', space=vmem, size = 0x10000, scoped, tag = 'output window, operand 0']
    #allocation6 [shape = 's32[2]{0}', space=sflag, size = 0x8, scoped, tag = 'scoped memory for tpu_custom_call.1']
    %9 = vsyncpa [#allocation6], 0
    %s10 = scalar_lea.sflag [#allocation6], 1
    %11 = vsyncpa %s10, 0
    loop: start=0, step=1, limit=4
    $region2: #{tpu_custom_call.1} parent=1 // loop_pre_header
      _
    $region3: #{tpu_custom_call.1} parent=1 // loop_header
      %s13 = sphi 0, %s17
      %p14 = scmp.ge.s32.totalorder %s13, 4
      %s20 = sphi 0, %s32
      %s21 = sphi 0, %s28
      %s22 = sphi 0, %s20
      %s23 = sphi 0, %s21
      %s24 = sphi 0, %s22
      %s25 = sphi 0, %s23
      %s35 = sphi 0, %s37
      %s38 = sphi 0, %s35
      %s39 = sphi 0, %s38
      %s55 = sphi 0, %s39
      %s61 = sphi 0, %s63
      %s64 = sphi 0, %s61
      %s65 = sphi 0, %s64
      %s81 = sphi 0, %s65
      %s85 = sphi 0, %s85
      %s87 = sphi 0, %s85
      %s88 = sphi 0, %s87
      %s102 = sphi 0, %s88
      %s110 = sphi 0, %s112
      %s113 = sphi 0, %s110
      %s114 = sphi 0, %s113
      %s130 = sphi 0, %s114
      %s136 = sphi 0, %s138
      %s139 = sphi 0, %s136
      %s140 = sphi 0, %s139
      %s156 = sphi 0, %s140
    $region4: #{tpu_custom_call.1} parent=1 // loop_header_branch
      %16 = sbr.rel (%p14) target = $region8
    $region5: #{tpu_custom_call.1} parent=1 // loop_body
      %s18 = ssub.s32 %s13, 1
      %s19 = ssub.s32 %s13, 2
      %s26 = sadd.s32 1, %s21
      %p27 = scmp.ge.s32.totalorder %s26, 1
      %s28 = scalar_select %p27, 0, %s26
      %s29 = sadd.s32 1, %s20
      %s30 = scalar_select %p27, %s29, %s20
      %p31 = scmp.ge.s32.totalorder %s30, 2
      %s32 = scalar_select %p31, 0, %s30
      %s33 = ssub.s32 %s20, %s32
      %p34 = scmp.eq.s32.totalorder %s33, 0
      %s36 = sadd.s32 %s35, 1
      %s37 = scalar_select %p34, %s35, %s36
      %p40 = pneg %p34
      %p41 = scmp.eq.s32.totalorder %s13, 1
      %p42 = por %p40, %p41
      %p43 = scmp.ne.s32.totalorder %s35, %s38
      %p44 = scmp.eq.s32.totalorder %s13, 0
      %p45 = por %p43, %p44
      %p46 = scmp.ne.s32.totalorder %s35, %s38
      %p47 = scmp.eq.s32.totalorder %s18, 1
      %p48 = por %p46, %p47
      %p49 = scmp.ne.s32.totalorder %s38, %s39
      %p50 = scmp.eq.s32.totalorder %s18, 0
      %p51 = por %p49, %p50
      %p52 = scmp.ne.s32.totalorder %s38, %s39
      %p53 = scmp.eq.s32.totalorder %s19, 1
      %p54 = por %p52, %p53
      %p56 = scmp.ne.s32.totalorder %s39, %s55
      %p57 = scmp.eq.s32.totalorder %s19, 0
      %p58 = por %p56, %p57
      %s59 = ssub.s32 %s21, %s28
      %p60 = scmp.eq.s32.totalorder %s59, 0
      %s62 = sadd.s32 %s61, 1
      %s63 = scalar_select %p60, %s61, %s62
      %p66 = pneg %p60
      %p67 = scmp.eq.s32.totalorder %s13, 1
      %p68 = por %p66, %p67
      %p69 = scmp.ne.s32.totalorder %s61, %s64
      %p70 = scmp.eq.s32.totalorder %s13, 0
      %p71 = por %p69, %p70
      %p72 = scmp.ne.s32.totalorder %s61, %s64
      %p73 = scmp.eq.s32.totalorder %s18, 1
      %p74 = por %p72, %p73
      %p75 = scmp.ne.s32.totalorder %s64, %s65
      %p76 = scmp.eq.s32.totalorder %s18, 0
      %p77 = por %p75, %p76
      %p78 = scmp.ne.s32.totalorder %s64, %s65
      %p79 = scmp.eq.s32.totalorder %s19, 1
      %p80 = por %p78, %p79
      %p82 = scmp.ne.s32.totalorder %s65, %s81
      %p83 = scmp.eq.s32.totalorder %s19, 0
      %p84 = por %p82, %p83
      %s86 = sadd.s32 %s85, 1
      %p89 = scmp.eq.s32.totalorder %s13, 1
      %p90 = scmp.ne.s32.totalorder %s85, %s87
      %p91 = scmp.eq.s32.totalorder %s13, 0
      %p92 = por %p90, %p91
      %p93 = scmp.ne.s32.totalorder %s85, %s87
      %p94 = scmp.eq.s32.totalorder %s18, 1
      %p95 = por %p93, %p94
      %p96 = scmp.ne.s32.totalorder %s87, %s88
      %p97 = scmp.eq.s32.totalorder %s18, 0
      %p98 = por %p96, %p97
      %p99 = scmp.ne.s32.totalorder %s87, %s88
      %p100 = scmp.eq.s32.totalorder %s19, 1
      %p101 = por %p99, %p100
      %p103 = scmp.ne.s32.totalorder %s88, %s102
      %p104 = scmp.eq.s32.totalorder %s19, 0
      %p105 = por %p103, %p104
      %s106 = ssub.s32 %s20, %s32
      %s107 = ssub.s32 %s21, %s28
      %s108 = sor.u32 %s106, %s107
      %p109 = scmp.eq.s32.totalorder %s108, 0
      %s111 = sadd.s32 %s110, 1
      %s112 = scalar_select %p109, %s110, %s111
      %p115 = pneg %p109
      %p116 = scmp.eq.s32.totalorder %s13, 1
      %p117 = por %p115, %p116
      %p118 = scmp.ne.s32.totalorder %s110, %s113
      %p119 = scmp.eq.s32.totalorder %s13, 0
      %p120 = por %p118, %p119
      %p121 = scmp.ne.s32.totalorder %s110, %s113
      %p122 = scmp.eq.s32.totalorder %s18, 1
      %p123 = por %p121, %p122
      %p124 = scmp.ne.s32.totalorder %s113, %s114
      %p125 = scmp.eq.s32.totalorder %s18, 0
      %p126 = por %p124, %p125
      %p127 = scmp.ne.s32.totalorder %s113, %s114
      %p128 = scmp.eq.s32.totalorder %s19, 1
      %p129 = por %p127, %p128
      %p131 = scmp.ne.s32.totalorder %s114, %s130
      %p132 = scmp.eq.s32.totalorder %s19, 0
      %p133 = por %p131, %p132
      %s134 = ssub.s32 %s20, %s32
      %p135 = scmp.eq.s32.totalorder %s134, 0
      %s137 = sadd.s32 %s136, 1
      %s138 = scalar_select %p135, %s136, %s137
      %p141 = pneg %p135
      %p142 = scmp.eq.s32.totalorder %s13, 1
      %p143 = por %p141, %p142
      %p144 = scmp.ne.s32.totalorder %s136, %s139
      %p145 = scmp.eq.s32.totalorder %s13, 0
      %p146 = por %p144, %p145
      %p147 = scmp.ne.s32.totalorder %s136, %s139
      %p148 = scmp.eq.s32.totalorder %s18, 1
      %p149 = por %p147, %p148
      %p150 = scmp.ne.s32.totalorder %s139, %s140
      %p151 = scmp.eq.s32.totalorder %s18, 0
      %p152 = por %p150, %p151
      %p153 = scmp.ne.s32.totalorder %s139, %s140
      %p154 = scmp.eq.s32.totalorder %s19, 1
      %p155 = por %p153, %p154
      %p157 = scmp.ne.s32.totalorder %s140, %s156
      %p158 = scmp.eq.s32.totalorder %s19, 0
      %p159 = por %p157, %p158
      %p160 = scmp.le.s32.totalorder 1, %s13
      %p161 = scmp.lt.s32.totalorder %s13, 3
      %p162 = pnand %p160, %p161
      %p163 = pneg %p162
      // Predicated region
      $region9: #{tpu_custom_call.1} parent=5 // pred_check
        _
      $region10: #{tpu_custom_call.1} parent=5 // pred_check_branch
        %165 = sbr.rel (%p162) target = $region12
      $region11: #{tpu_custom_call.1} parent=5 // pred_region
        %s166 = ssub.s32 %s13, 1
        // Predicated region
        $region13: #{tpu_custom_call.1} parent=11 // pred_check
          %p167 = pneg %p77
        $region14: #{tpu_custom_call.1} parent=11 // pred_check_branch
          %169 = sbr.rel (%p167) target = $region16
        $region15: #{tpu_custom_call.1} parent=11 // pred_region
          %s170 = smul.u32 2, %s23
          %p171 = scmp.lt.s32.totalorder %s170, 1
          %s172 = scalar_select %p171, %s170, 1
          %s173 = scalar_lea.vmem %s1, %s172
          %s174 = smul.u32 2, %s23
        $region16: #{tpu_custom_call.1} parent=11 // pred_fallthru
          _
        // Predicated region
        $region17: #{tpu_custom_call.1} parent=11 // pred_check
          %p175 = pneg %p98
        $region18: #{tpu_custom_call.1} parent=11 // pred_check_branch
          %177 = sbr.rel (%p175) target = $region20
        $region19: #{tpu_custom_call.1} parent=11 // pred_region
          _
        $region20: #{tpu_custom_call.1} parent=11 // pred_fallthru
          _
      $region12: #{tpu_custom_call.1} parent=5 // pred_fallthru
        _
      %p178 = scmp.lt.s32.totalorder %s13, 2
      // Predicated region
      $region21: #{tpu_custom_call.1} parent=5 // pred_check
        %p179 = pneg %p178
      $region22: #{tpu_custom_call.1} parent=5 // pred_check_branch
        %181 = sbr.rel (%p179) target = $region24
      $region23: #{tpu_custom_call.1} parent=5 // pred_region
        // Predicated region
        $region25: #{tpu_custom_call.1} parent=23 // pred_check
          %p182 = pneg %p45
        $region26: #{tpu_custom_call.1} parent=23 // pred_check_branch
          %184 = sbr.rel (%p182) target = $region28
        $region27: #{tpu_custom_call.1} parent=23 // pred_region
          %s185 = smul.u32 16, %s20
          %p186 = scmp.lt.s32.totalorder %s185, 31
          %s187 = scalar_select %p186, %s185, 31
          %s188 = smul.addr %s187, 8
          %s189 = scalar_lea.vmem %s0, %s188
          %s190 = smul.u32 16, %s20
        $region28: #{tpu_custom_call.1} parent=23 // pred_fallthru
          _
        // Predicated region
        $region29: #{tpu_custom_call.1} parent=23 // pred_check
          %p191 = pneg %p120
        $region30: #{tpu_custom_call.1} parent=23 // pred_check_branch
          %193 = sbr.rel (%p191) target = $region32
        $region31: #{tpu_custom_call.1} parent=23 // pred_region
          %s194 = smul.u32 4, %s20
          %s195 = smul.u32 2, %s21
          %p196 = scmp.lt.s32.totalorder %s194, 7
          %s197 = scalar_select %p196, %s194, 7
          %p198 = scmp.lt.s32.totalorder %s195, 1
          %s199 = scalar_select %p198, %s195, 1
          %s200 = smul.addr %s197, 2
          %s201 = sadd.s32 %s199, %s200
          %s202 = smul.addr %s201, 8
          %s203 = scalar_lea.vmem %s3, %s202
          %s204 = smul.u32 4, %s20
          %s205 = smul.u32 2, %s21
        $region32: #{tpu_custom_call.1} parent=23 // pred_fallthru
          _
      $region24: #{tpu_custom_call.1} parent=5 // pred_fallthru
        _
      %p206 = scmp.le.s32.totalorder 1, %s13
      %p207 = scmp.lt.s32.totalorder %s13, 3
      %p208 = pnand %p206, %p207
      %p209 = pneg %p208
      // Predicated region
      $region33: #{tpu_custom_call.1} parent=5 // pred_check
        _
      $region34: #{tpu_custom_call.1} parent=5 // pred_check_branch
        %211 = sbr.rel (%p208) target = $region36
      $region35: #{tpu_custom_call.1} parent=5 // pred_region
        %s212 = ssub.s32 %s13, 1
        %s213 = smul.u32 16, %s22
        %p214 = scmp.lt.s32.totalorder %s213, 31
        %s215 = scalar_select %p214, %s213, 31
        %s216 = smul.addr %s215, 8
        %s217 = scalar_lea.vmem %s0, %s216
        %p218 = pneg %p51
        %p219 = pneg %p48
        %s220 = smul.u32 2, %s23
        %p221 = scmp.lt.s32.totalorder %s220, 1
        %s222 = scalar_select %p221, %s220, 1
        %s223 = scalar_lea.vmem %s1, %s222
        %p224 = pneg %p77
        %p225 = pneg %p74
        %p226 = pneg %p98
        %p227 = pneg %p95
        %s228 = smul.u32 4, %s22
        %s229 = smul.u32 2, %s23
        %p230 = scmp.lt.s32.totalorder %s228, 7
        %s231 = scalar_select %p230, %s228, 7
        %p232 = scmp.lt.s32.totalorder %s229, 1
        %s233 = scalar_select %p232, %s229, 1
        %s234 = smul.addr %s231, 2
        %s235 = sadd.s32 %s233, %s234
        %s236 = smul.addr %s235, 8
        %s237 = scalar_lea.vmem %s3, %s236
        %p238 = pneg %p126
        %p239 = pneg %p123
        %p240 = pneg %p152
        %p241 = pneg %p149
        %s242 = sand.u32 %s139, 1
        %s243 = scalar_lea.sflag [#allocation6], %s242
        %s244 = sand.u32 %s139, 1
        %s245 = smul.addr %s244, 64
        %s246 = scalar_lea.vmem [#allocation5], %s245
        %s247 = smul.u32 16, %s22
        %p248 = scmp.lt.s32.totalorder %s247, 31
        %s249 = scalar_select %p248, %s247, 31
        %s250 = smul.addr %s249, 8
        %s251 = scalar_lea.vmem %s0, %s250
        %s252 = smul.u32 16, %s22
        %s253 = smul.u32 2, %s23
        %p254 = scmp.lt.s32.totalorder %s253, 1
        %s255 = scalar_select %p254, %s253, 1
        %s256 = scalar_lea.vmem %s1, %s255
        %s257 = smul.u32 2, %s23
        %s258 = smul.u32 4, %s22
        %s259 = smul.u32 2, %s23
        %p260 = scmp.lt.s32.totalorder %s258, 7
        %s261 = scalar_select %p260, %s258, 7
        %p262 = scmp.lt.s32.totalorder %s259, 1
        %s263 = scalar_select %p262, %s259, 1
        %s264 = smul.addr %s261, 2
        %s265 = sadd.s32 %s263, %s264
        %s266 = smul.addr %s265, 8
        %s267 = scalar_lea.vmem %s3, %s266
        %s268 = smul.u32 4, %s22
        %s269 = smul.u32 2, %s23
        %s270 = smul.u32 16, %s22
        %p273 = scmp.eq.s32.totalorder %s23, 0
        // Predicated region
        $region37: #{tpu_custom_call.1} parent=35 // pred_check
          %p274 = pneg %p273
        $region38: #{tpu_custom_call.1} parent=35 // pred_check_branch
          %276 = sbr.rel (%p274) target = $region40
        $region39: #{tpu_custom_call.1} parent=35 // pred_region
          %vm277 = vcmask 7168
          %278 = vst.msk [vmem:[#allocation2] sm:$0xff] %vm277, -inf
          %279 = vst.msk [vmem:[#allocation2 + $0x8] sm:$0xff] %vm277, -inf
          %280 = vst.msk [vmem:[#allocation2 + $0x10] sm:$0xff] %vm277, -inf
          %281 = vst.msk [vmem:[#allocation2 + $0x18] sm:$0xff] %vm277, -inf
          %282 = vst.msk [vmem:[#allocation2 + $0x20] sm:$0xff] %vm277, -inf
          %283 = vst.msk [vmem:[#allocation2 + $0x28] sm:$0xff] %vm277, -inf
          %284 = vst.msk [vmem:[#allocation2 + $0x30] sm:$0xff] %vm277, -inf
          %285 = vst.msk [vmem:[#allocation2 + $0x38] sm:$0xff] %vm277, -inf
          %286 = vst.msk [vmem:[#allocation2 + $0x40] sm:$0xff] %vm277, -inf
          %287 = vst.msk [vmem:[#allocation2 + $0x48] sm:$0xff] %vm277, -inf
          %288 = vst.msk [vmem:[#allocation2 + $0x50] sm:$0xff] %vm277, -inf
          %289 = vst.msk [vmem:[#allocation2 + $0x58] sm:$0xff] %vm277, -inf
          %290 = vst.msk [vmem:[#allocation2 + $0x60] sm:$0xff] %vm277, -inf
          %291 = vst.msk [vmem:[#allocation2 + $0x68] sm:$0xff] %vm277, -inf
          %292 = vst.msk [vmem:[#allocation2 + $0x70] sm:$0xff] %vm277, -inf
          %293 = vst.msk [vmem:[#allocation2 + $0x78] sm:$0xff] %vm277, -inf
          %294 = vst.msk [vmem:[#allocation3] sm:$0xff] %vm277, 0.0
          %295 = vst.msk [vmem:[#allocation3 + $0x8] sm:$0xff] %vm277, 0.0
          %296 = vst.msk [vmem:[#allocation3 + $0x10] sm:$0xff] %vm277, 0.0
          %297 = vst.msk [vmem:[#allocation3 + $0x18] sm:$0xff] %vm277, 0.0
          %298 = vst.msk [vmem:[#allocation3 + $0x20] sm:$0xff] %vm277, 0.0
          %299 = vst.msk [vmem:[#allocation3 + $0x28] sm:$0xff] %vm277, 0.0
          %300 = vst.msk [vmem:[#allocation3 + $0x30] sm:$0xff] %vm277, 0.0
          %301 = vst.msk [vmem:[#allocation3 + $0x38] sm:$0xff] %vm277, 0.0
          %302 = vst.msk [vmem:[#allocation3 + $0x40] sm:$0xff] %vm277, 0.0
          %303 = vst.msk [vmem:[#allocation3 + $0x48] sm:$0xff] %vm277, 0.0
          %304 = vst.msk [vmem:[#allocation3 + $0x50] sm:$0xff] %vm277, 0.0
          %305 = vst.msk [vmem:[#allocation3 + $0x58] sm:$0xff] %vm277, 0.0
          %306 = vst.msk [vmem:[#allocation3 + $0x60] sm:$0xff] %vm277, 0.0
          %307 = vst.msk [vmem:[#allocation3 + $0x68] sm:$0xff] %vm277, 0.0
          %308 = vst.msk [vmem:[#allocation3 + $0x70] sm:$0xff] %vm277, 0.0
          %309 = vst.msk [vmem:[#allocation3 + $0x78] sm:$0xff] %vm277, 0.0
          %310 = vst [vmem:[#allocation4] sm:$0xff] 0.0
          %311 = vst [vmem:[#allocation4 + $0x8] sm:$0xff] 0.0
          %312 = vst [vmem:[#allocation4 + $0x10] sm:$0xff] 0.0
          %313 = vst [vmem:[#allocation4 + $0x18] sm:$0xff] 0.0
          %314 = vst [vmem:[#allocation4 + $0x20] sm:$0xff] 0.0
          %315 = vst [vmem:[#allocation4 + $0x28] sm:$0xff] 0.0
          %316 = vst [vmem:[#allocation4 + $0x30] sm:$0xff] 0.0
          %317 = vst [vmem:[#allocation4 + $0x38] sm:$0xff] 0.0
          %318 = vst [vmem:[#allocation4 + $0x40] sm:$0xff] 0.0
          %319 = vst [vmem:[#allocation4 + $0x48] sm:$0xff] 0.0
          %320 = vst [vmem:[#allocation4 + $0x50] sm:$0xff] 0.0
          %321 = vst [vmem:[#allocation4 + $0x58] sm:$0xff] 0.0
          %322 = vst [vmem:[#allocation4 + $0x60] sm:$0xff] 0.0
          %323 = vst [vmem:[#allocation4 + $0x68] sm:$0xff] 0.0
          %324 = vst [vmem:[#allocation4 + $0x70] sm:$0xff] 0.0
          %325 = vst [vmem:[#allocation4 + $0x78] sm:$0xff] 0.0
        $region40: #{tpu_custom_call.1} parent=35 // pred_fallthru
          _
        %v326 = vld [vmem:[%s267] sm:$0xff]
        %v327 = vld [vmem:[%s267 + $0x8] sm:$0xff]
        %v328 = vld [vmem:[%s267 + $0x10] sm:$0xff]
        %v329 = vld [vmem:[%s267 + $0x18] sm:$0xff]
        %v330 = vld [vmem:[%s267 + $0x20] sm:$0xff]
        %v331 = vld [vmem:[%s267 + $0x28] sm:$0xff]
        %v332 = vld [vmem:[%s267 + $0x30] sm:$0xff]
        %v333 = vld [vmem:[%s267 + $0x38] sm:$0xff]
        %vm334 = vnez %v326
        %vm335 = vnez %v327
        %vm336 = vnez %v328
        %vm337 = vnez %v329
        %vm338 = vnez %v330
        %vm339 = vnez %v331
        %vm340 = vnez %v332
        %vm341 = vnez %v333
        %v342 = vld [vmem:[%s251] sm:$0xff]
        %v343 = vld [vmem:[%s251 + $0x8] sm:$0xff]
        %v344 = vld [vmem:[%s251 + $0x10] sm:$0xff]
        %v345 = vld [vmem:[%s251 + $0x18] sm:$0xff]
        %v346 = vld [vmem:[%s251 + $0x20] sm:$0xff]
        %v347 = vld [vmem:[%s251 + $0x28] sm:$0xff]
        %v348 = vld [vmem:[%s251 + $0x30] sm:$0xff]
        %v349 = vld [vmem:[%s251 + $0x38] sm:$0xff]
        %v350 = vld [vmem:[%s251 + $0x40] sm:$0xff]
        %v351 = vld [vmem:[%s251 + $0x48] sm:$0xff]
        %v352 = vld [vmem:[%s251 + $0x50] sm:$0xff]
        %v353 = vld [vmem:[%s251 + $0x58] sm:$0xff]
        %v354 = vld [vmem:[%s251 + $0x60] sm:$0xff]
        %v355 = vld [vmem:[%s251 + $0x68] sm:$0xff]
        %v356 = vld [vmem:[%s251 + $0x70] sm:$0xff]
        %v357 = vld [vmem:[%s251 + $0x78] sm:$0xff]
        %v358 = vld [vmem:[%s256] sm:$0x3]
        %360 = vset.pattern.permute.xlu0 0
        %361 = vperm.xlu0 %360, %v342
        %v362 = vpop.permute.xlu0 %361
        %365 = vset.pattern.permute.xlu0 0
        %366 = vperm.xlu0 %365, %v343
        %v367 = vpop.permute.xlu0 %366
        %370 = vset.pattern.permute.xlu0 0
        %371 = vperm.xlu0 %370, %v344
        %v372 = vpop.permute.xlu0 %371
        %375 = vset.pattern.permute.xlu0 0
        %376 = vperm.xlu0 %375, %v345
        %v377 = vpop.permute.xlu0 %376
        %380 = vset.pattern.permute.xlu0 0
        %381 = vperm.xlu0 %380, %v346
        %v382 = vpop.permute.xlu0 %381
        %385 = vset.pattern.permute.xlu0 0
        %386 = vperm.xlu0 %385, %v347
        %v387 = vpop.permute.xlu0 %386
        %390 = vset.pattern.permute.xlu0 0
        %391 = vperm.xlu0 %390, %v348
        %v392 = vpop.permute.xlu0 %391
        %395 = vset.pattern.permute.xlu0 0
        %396 = vperm.xlu0 %395, %v349
        %v397 = vpop.permute.xlu0 %396
        %400 = vset.pattern.permute.xlu0 0
        %401 = vperm.xlu0 %400, %v350
        %v402 = vpop.permute.xlu0 %401
        %405 = vset.pattern.permute.xlu0 0
        %406 = vperm.xlu0 %405, %v351
        %v407 = vpop.permute.xlu0 %406
        %410 = vset.pattern.permute.xlu0 0
        %411 = vperm.xlu0 %410, %v352
        %v412 = vpop.permute.xlu0 %411
        %415 = vset.pattern.permute.xlu0 0
        %416 = vperm.xlu0 %415, %v353
        %v417 = vpop.permute.xlu0 %416
        %420 = vset.pattern.permute.xlu0 0
        %421 = vperm.xlu0 %420, %v354
        %v422 = vpop.permute.xlu0 %421
        %425 = vset.pattern.permute.xlu0 0
        %426 = vperm.xlu0 %425, %v355
        %v427 = vpop.permute.xlu0 %426
        %430 = vset.pattern.permute.xlu0 0
        %431 = vperm.xlu0 %430, %v356
        %v432 = vpop.permute.xlu0 %431
        %435 = vset.pattern.permute.xlu0 0
        %436 = vperm.xlu0 %435, %v357
        %v437 = vpop.permute.xlu0 %436
        %v440 = vperm.slane %v358, 0
        %v441 = vperm.slane %v358, 1
        %v444 = vadd.f32 %v362, %v440
        %v445 = vadd.f32 %v362, %v441
        %v446 = vadd.f32 %v367, %v440
        %v447 = vadd.f32 %v367, %v441
        %v448 = vadd.f32 %v372, %v440
        %v449 = vadd.f32 %v372, %v441
        %v450 = vadd.f32 %v377, %v440
        %v451 = vadd.f32 %v377, %v441
        %v452 = vadd.f32 %v382, %v440
        %v453 = vadd.f32 %v382, %v441
        %v454 = vadd.f32 %v387, %v440
        %v455 = vadd.f32 %v387, %v441
        %v456 = vadd.f32 %v392, %v440
        %v457 = vadd.f32 %v392, %v441
        %v458 = vadd.f32 %v397, %v440
        %v459 = vadd.f32 %v397, %v441
        %v460 = vadd.f32 %v402, %v440
        %v461 = vadd.f32 %v402, %v441
        %v462 = vadd.f32 %v407, %v440
        %v463 = vadd.f32 %v407, %v441
        %v464 = vadd.f32 %v412, %v440
        %v465 = vadd.f32 %v412, %v441
        %v466 = vadd.f32 %v417, %v440
        %v467 = vadd.f32 %v417, %v441
        %v468 = vadd.f32 %v422, %v440
        %v469 = vadd.f32 %v422, %v441
        %v470 = vadd.f32 %v427, %v440
        %v471 = vadd.f32 %v427, %v441
        %v472 = vadd.f32 %v432, %v440
        %v473 = vadd.f32 %v432, %v441
        %v474 = vadd.f32 %v437, %v440
        %v475 = vadd.f32 %v437, %v441
        %v476 = vmul.f32 %v444, 0.01
        %v477 = vmul.f32 %v445, 0.01
        %v478 = vmul.f32 %v446, 0.01
        %v479 = vmul.f32 %v447, 0.01
        %v480 = vmul.f32 %v448, 0.01
        %v481 = vmul.f32 %v449, 0.01
        %v482 = vmul.f32 %v450, 0.01
        %v483 = vmul.f32 %v451, 0.01
        %v484 = vmul.f32 %v452, 0.01
        %v485 = vmul.f32 %v453, 0.01
        %v486 = vmul.f32 %v454, 0.01
        %v487 = vmul.f32 %v455, 0.01
        %v488 = vmul.f32 %v456, 0.01
        %v489 = vmul.f32 %v457, 0.01
        %v490 = vmul.f32 %v458, 0.01
        %v491 = vmul.f32 %v459, 0.01
        %v492 = vmul.f32 %v460, 0.01
        %v493 = vmul.f32 %v461, 0.01
        %v494 = vmul.f32 %v462, 0.01
        %v495 = vmul.f32 %v463, 0.01
        %v496 = vmul.f32 %v464, 0.01
        %v497 = vmul.f32 %v465, 0.01
        %v498 = vmul.f32 %v466, 0.01
        %v499 = vmul.f32 %v467, 0.01
        %v500 = vmul.f32 %v468, 0.01
        %v501 = vmul.f32 %v469, 0.01
        %v502 = vmul.f32 %v470, 0.01
        %v503 = vmul.f32 %v471, 0.01
        %v504 = vmul.f32 %v472, 0.01
        %v505 = vmul.f32 %v473, 0.01
        %v506 = vmul.f32 %v474, 0.01
        %v507 = vmul.f32 %v475, 0.01
        %v508 = vmax.f32 %v444, %v476
        %v509 = vmax.f32 %v445, %v477
        %v510 = vmax.f32 %v446, %v478
        %v511 = vmax.f32 %v447, %v479
        %v512 = vmax.f32 %v448, %v480
        %v513 = vmax.f32 %v449, %v481
        %v514 = vmax.f32 %v450, %v482
        %v515 = vmax.f32 %v451, %v483
        %v516 = vmax.f32 %v452, %v484
        %v517 = vmax.f32 %v453, %v485
        %v518 = vmax.f32 %v454, %v486
        %v519 = vmax.f32 %v455, %v487
        %v520 = vmax.f32 %v456, %v488
        %v521 = vmax.f32 %v457, %v489
        %v522 = vmax.f32 %v458, %v490
        %v523 = vmax.f32 %v459, %v491
        %v524 = vmax.f32 %v460, %v492
        %v525 = vmax.f32 %v461, %v493
        %v526 = vmax.f32 %v462, %v494
        %v527 = vmax.f32 %v463, %v495
        %v528 = vmax.f32 %v464, %v496
        %v529 = vmax.f32 %v465, %v497
        %v530 = vmax.f32 %v466, %v498
        %v531 = vmax.f32 %v467, %v499
        %v532 = vmax.f32 %v468, %v500
        %v533 = vmax.f32 %v469, %v501
        %v534 = vmax.f32 %v470, %v502
        %v535 = vmax.f32 %v471, %v503
        %v536 = vmax.f32 %v472, %v504
        %v537 = vmax.f32 %v473, %v505
        %v538 = vmax.f32 %v474, %v506
        %v539 = vmax.f32 %v475, %v507
        %v540 = vsel %vm334, 16843009, 0
        %v541 = vsel %vm335, 16843009, 0
        %v542 = vsel %vm336, 16843009, 0
        %v543 = vsel %vm337, 16843009, 0
        %v544 = vsel %vm338, 16843009, 0
        %v545 = vsel %vm339, 16843009, 0
        %v546 = vsel %vm340, 16843009, 0
        %v547 = vsel %vm341, 16843009, 0
        %v548 = vunpack.c.0.s8 %v540
        %v549 = vunpack.c.0.s8 %v541
        %v550 = vunpack.c.1.s8 %v540
        %v551 = vunpack.c.1.s8 %v541
        %v552 = vunpack.c.2.s8 %v540
        %v553 = vunpack.c.2.s8 %v541
        %v554 = vunpack.c.3.s8 %v540
        %v555 = vunpack.c.3.s8 %v541
        %v556 = vunpack.c.0.s8 %v542
        %v557 = vunpack.c.0.s8 %v543
        %v558 = vunpack.c.1.s8 %v542
        %v559 = vunpack.c.1.s8 %v543
        %v560 = vunpack.c.2.s8 %v542
        %v561 = vunpack.c.2.s8 %v543
        %v562 = vunpack.c.3.s8 %v542
        %v563 = vunpack.c.3.s8 %v543
        %v564 = vunpack.c.0.s8 %v544
        %v565 = vunpack.c.0.s8 %v545
        %v566 = vunpack.c.1.s8 %v544
        %v567 = vunpack.c.1.s8 %v545
        %v568 = vunpack.c.2.s8 %v544
        %v569 = vunpack.c.2.s8 %v545
        %v570 = vunpack.c.3.s8 %v544
        %v571 = vunpack.c.3.s8 %v545
        %v572 = vunpack.c.0.s8 %v546
        %v573 = vunpack.c.0.s8 %v547
        %v574 = vunpack.c.1.s8 %v546
        %v575 = vunpack.c.1.s8 %v547
        %v576 = vunpack.c.2.s8 %v546
        %v577 = vunpack.c.2.s8 %v547
        %v578 = vunpack.c.3.s8 %v546
        %v579 = vunpack.c.3.s8 %v547
        %v580 = vpack.c.b16 %v549, %v548
        %v581 = vpack.c.b8 %v580, %v580
        %v582 = vpack.c.b16 %v551, %v550
        %v583 = vpack.c.b8 %v582, %v582
        %v584 = vpack.c.b16 %v553, %v552
        %v585 = vpack.c.b8 %v584, %v584
        %v586 = vpack.c.b16 %v555, %v554
        %v587 = vpack.c.b8 %v586, %v586
        %v588 = vpack.c.b16 %v557, %v556
        %v589 = vpack.c.b8 %v588, %v588
        %v590 = vpack.c.b16 %v559, %v558
        %v591 = vpack.c.b8 %v590, %v590
        %v592 = vpack.c.b16 %v561, %v560
        %v593 = vpack.c.b8 %v592, %v592
        %v594 = vpack.c.b16 %v563, %v562
        %v595 = vpack.c.b8 %v594, %v594
        %v596 = vpack.c.b16 %v565, %v564
        %v597 = vpack.c.b8 %v596, %v596
        %v598 = vpack.c.b16 %v567, %v566
        %v599 = vpack.c.b8 %v598, %v598
        %v600 = vpack.c.b16 %v569, %v568
        %v601 = vpack.c.b8 %v600, %v600
        %v602 = vpack.c.b16 %v571, %v570
        %v603 = vpack.c.b8 %v602, %v602
        %v604 = vpack.c.b16 %v573, %v572
        %v605 = vpack.c.b8 %v604, %v604
        %v606 = vpack.c.b16 %v575, %v574
        %v607 = vpack.c.b8 %v606, %v606
        %v608 = vpack.c.b16 %v577, %v576
        %v609 = vpack.c.b8 %v608, %v608
        %v610 = vpack.c.b16 %v579, %v578
        %v611 = vpack.c.b8 %v610, %v610
        %vm612 = vnez %v581
        %vm613 = vnez %v583
        %vm614 = vnez %v585
        %vm615 = vnez %v587
        %vm616 = vnez %v589
        %vm617 = vnez %v591
        %vm618 = vnez %v593
        %vm619 = vnez %v595
        %vm620 = vnez %v597
        %vm621 = vnez %v599
        %vm622 = vnez %v601
        %vm623 = vnez %v603
        %vm624 = vnez %v605
        %vm625 = vnez %v607
        %vm626 = vnez %v609
        %vm627 = vnez %v611
        %v628 = vsel %vm612, 16843009, 0
        %v629 = vsel %vm613, 16843009, 0
        %v630 = vsel %vm614, 16843009, 0
        %v631 = vsel %vm615, 16843009, 0
        %v632 = vsel %vm616, 16843009, 0
        %v633 = vsel %vm617, 16843009, 0
        %v634 = vsel %vm618, 16843009, 0
        %v635 = vsel %vm619, 16843009, 0
        %v636 = vsel %vm620, 16843009, 0
        %v637 = vsel %vm621, 16843009, 0
        %v638 = vsel %vm622, 16843009, 0
        %v639 = vsel %vm623, 16843009, 0
        %v640 = vsel %vm624, 16843009, 0
        %v641 = vsel %vm625, 16843009, 0
        %v642 = vsel %vm626, 16843009, 0
        %v643 = vsel %vm627, 16843009, 0
        %v644 = vunpack.c.0.s8 %v628
        %v645 = vunpack.c.1.s8 %v628
        %v646 = vunpack.c.0.s8 %v629
        %v647 = vunpack.c.1.s8 %v629
        %v648 = vunpack.c.0.s8 %v630
        %v649 = vunpack.c.1.s8 %v630
        %v650 = vunpack.c.0.s8 %v631
        %v651 = vunpack.c.1.s8 %v631
        %v652 = vunpack.c.0.s8 %v632
        %v653 = vunpack.c.1.s8 %v632
        %v654 = vunpack.c.0.s8 %v633
        %v655 = vunpack.c.1.s8 %v633
        %v656 = vunpack.c.0.s8 %v634
        %v657 = vunpack.c.1.s8 %v634
        %v658 = vunpack.c.0.s8 %v635
        %v659 = vunpack.c.1.s8 %v635
        %v660 = vunpack.c.0.s8 %v636
        %v661 = vunpack.c.1.s8 %v636
        %v662 = vunpack.c.0.s8 %v637
        %v663 = vunpack.c.1.s8 %v637
        %v664 = vunpack.c.0.s8 %v638
        %v665 = vunpack.c.1.s8 %v638
        %v666 = vunpack.c.0.s8 %v639
        %v667 = vunpack.c.1.s8 %v639
        %v668 = vunpack.c.0.s8 %v640
        %v669 = vunpack.c.1.s8 %v640
        %v670 = vunpack.c.0.s8 %v641
        %v671 = vunpack.c.1.s8 %v641
        %v672 = vunpack.c.0.s8 %v642
        %v673 = vunpack.c.1.s8 %v642
        %v674 = vunpack.c.0.s8 %v643
        %v675 = vunpack.c.1.s8 %v643
        %vm676 = vcmp.ne.s32.totalorder %v644, 0
        %vm677 = vcmp.ne.s32.totalorder %v645, 0
        %vm678 = vcmp.ne.s32.totalorder %v646, 0
        %vm679 = vcmp.ne.s32.totalorder %v647, 0
        %vm680 = vcmp.ne.s32.totalorder %v648, 0
        %vm681 = vcmp.ne.s32.totalorder %v649, 0
        %vm682 = vcmp.ne.s32.totalorder %v650, 0
        %vm683 = vcmp.ne.s32.totalorder %v651, 0
        %vm684 = vcmp.ne.s32.totalorder %v652, 0
        %vm685 = vcmp.ne.s32.totalorder %v653, 0
        %vm686 = vcmp.ne.s32.totalorder %v654, 0
        %vm687 = vcmp.ne.s32.totalorder %v655, 0
        %vm688 = vcmp.ne.s32.totalorder %v656, 0
        %vm689 = vcmp.ne.s32.totalorder %v657, 0
        %vm690 = vcmp.ne.s32.totalorder %v658, 0
        %vm691 = vcmp.ne.s32.totalorder %v659, 0
        %vm692 = vcmp.ne.s32.totalorder %v660, 0
        %vm693 = vcmp.ne.s32.totalorder %v661, 0
        %vm694 = vcmp.ne.s32.totalorder %v662, 0
        %vm695 = vcmp.ne.s32.totalorder %v663, 0
        %vm696 = vcmp.ne.s32.totalorder %v664, 0
        %vm697 = vcmp.ne.s32.totalorder %v665, 0
        %vm698 = vcmp.ne.s32.totalorder %v666, 0
        %vm699 = vcmp.ne.s32.totalorder %v667, 0
        %vm700 = vcmp.ne.s32.totalorder %v668, 0
        %vm701 = vcmp.ne.s32.totalorder %v669, 0
        %vm702 = vcmp.ne.s32.totalorder %v670, 0
        %vm703 = vcmp.ne.s32.totalorder %v671, 0
        %vm704 = vcmp.ne.s32.totalorder %v672, 0
        %vm705 = vcmp.ne.s32.totalorder %v673, 0
        %vm706 = vcmp.ne.s32.totalorder %v674, 0
        %vm707 = vcmp.ne.s32.totalorder %v675, 0
        %v708 = vsel %vm676, %v508, -1e+30
        %v709 = vsel %vm677, %v509, -1e+30
        %v710 = vsel %vm678, %v510, -1e+30
        %v711 = vsel %vm679, %v511, -1e+30
        %v712 = vsel %vm680, %v512, -1e+30
        %v713 = vsel %vm681, %v513, -1e+30
        %v714 = vsel %vm682, %v514, -1e+30
        %v715 = vsel %vm683, %v515, -1e+30
        %v716 = vsel %vm684, %v516, -1e+30
        %v717 = vsel %vm685, %v517, -1e+30
        %v718 = vsel %vm686, %v518, -1e+30
        %v719 = vsel %vm687, %v519, -1e+30
        %v720 = vsel %vm688, %v520, -1e+30
        %v721 = vsel %vm689, %v521, -1e+30
        %v722 = vsel %vm690, %v522, -1e+30
        %v723 = vsel %vm691, %v523, -1e+30
        %v724 = vsel %vm692, %v524, -1e+30
        %v725 = vsel %vm693, %v525, -1e+30
        %v726 = vsel %vm694, %v526, -1e+30
        %v727 = vsel %vm695, %v527, -1e+30
        %v728 = vsel %vm696, %v528, -1e+30
        %v729 = vsel %vm697, %v529, -1e+30
        %v730 = vsel %vm698, %v530, -1e+30
        %v731 = vsel %vm699, %v531, -1e+30
        %v732 = vsel %vm700, %v532, -1e+30
        %v733 = vsel %vm701, %v533, -1e+30
        %v734 = vsel %vm702, %v534, -1e+30
        %v735 = vsel %vm703, %v535, -1e+30
        %v736 = vsel %vm704, %v536, -1e+30
        %v737 = vsel %vm705, %v537, -1e+30
        %v738 = vsel %vm706, %v538, -1e+30
        %v739 = vsel %vm707, %v539, -1e+30
        %v740 = vld [vmem:[#allocation2] sm:$0xff]
        %v741 = vld [vmem:[#allocation2 + $0x8] sm:$0xff]
        %v742 = vld [vmem:[#allocation2 + $0x10] sm:$0xff]
        %v743 = vld [vmem:[#allocation2 + $0x18] sm:$0xff]
        %v744 = vld [vmem:[#allocation2 + $0x20] sm:$0xff]
        %v745 = vld [vmem:[#allocation2 + $0x28] sm:$0xff]
        %v746 = vld [vmem:[#allocation2 + $0x30] sm:$0xff]
        %v747 = vld [vmem:[#allocation2 + $0x38] sm:$0xff]
        %v748 = vld [vmem:[#allocation2 + $0x40] sm:$0xff]
        %v749 = vld [vmem:[#allocation2 + $0x48] sm:$0xff]
        %v750 = vld [vmem:[#allocation2 + $0x50] sm:$0xff]
        %v751 = vld [vmem:[#allocation2 + $0x58] sm:$0xff]
        %v752 = vld [vmem:[#allocation2 + $0x60] sm:$0xff]
        %v753 = vld [vmem:[#allocation2 + $0x68] sm:$0xff]
        %v754 = vld [vmem:[#allocation2 + $0x70] sm:$0xff]
        %v755 = vld [vmem:[#allocation2 + $0x78] sm:$0xff]
        %v756 = vmax.f32 %v708, %v709
        %757 = vmax.xlane.f32.xlu0 %v756
        %v758 = vpop.xlane.xlu0 %757
        %v759 = vmax.f32 %v710, %v711
        %760 = vmax.xlane.f32.xlu0 %v759
        %v761 = vpop.xlane.xlu0 %760
        %v762 = vmax.f32 %v712, %v713
        %763 = vmax.xlane.f32.xlu0 %v762
        %v764 = vpop.xlane.xlu0 %763
        %v765 = vmax.f32 %v714, %v715
        %766 = vmax.xlane.f32.xlu0 %v765
        %v767 = vpop.xlane.xlu0 %766
        %v768 = vmax.f32 %v716, %v717
        %769 = vmax.xlane.f32.xlu0 %v768
        %v770 = vpop.xlane.xlu0 %769
        %v771 = vmax.f32 %v718, %v719
        %772 = vmax.xlane.f32.xlu0 %v771
        %v773 = vpop.xlane.xlu0 %772
        %v774 = vmax.f32 %v720, %v721
        %775 = vmax.xlane.f32.xlu0 %v774
        %v776 = vpop.xlane.xlu0 %775
        %v777 = vmax.f32 %v722, %v723
        %778 = vmax.xlane.f32.xlu0 %v777
        %v779 = vpop.xlane.xlu0 %778
        %v780 = vmax.f32 %v724, %v725
        %781 = vmax.xlane.f32.xlu0 %v780
        %v782 = vpop.xlane.xlu0 %781
        %v783 = vmax.f32 %v726, %v727
        %784 = vmax.xlane.f32.xlu0 %v783
        %v785 = vpop.xlane.xlu0 %784
        %v786 = vmax.f32 %v728, %v729
        %787 = vmax.xlane.f32.xlu0 %v786
        %v788 = vpop.xlane.xlu0 %787
        %v789 = vmax.f32 %v730, %v731
        %790 = vmax.xlane.f32.xlu0 %v789
        %v791 = vpop.xlane.xlu0 %790
        %v792 = vmax.f32 %v732, %v733
        %793 = vmax.xlane.f32.xlu0 %v792
        %v794 = vpop.xlane.xlu0 %793
        %v795 = vmax.f32 %v734, %v735
        %796 = vmax.xlane.f32.xlu0 %v795
        %v797 = vpop.xlane.xlu0 %796
        %v798 = vmax.f32 %v736, %v737
        %799 = vmax.xlane.f32.xlu0 %v798
        %v800 = vpop.xlane.xlu0 %799
        %v801 = vmax.f32 %v738, %v739
        %802 = vmax.xlane.f32.xlu0 %v801
        %v803 = vpop.xlane.xlu0 %802
        %v804 = vmax.f32 %v740, %v758
        %v805 = vmax.f32 %v741, %v761
        %v806 = vmax.f32 %v742, %v764
        %v807 = vmax.f32 %v743, %v767
        %v808 = vmax.f32 %v744, %v770
        %v809 = vmax.f32 %v745, %v773
        %v810 = vmax.f32 %v746, %v776
        %v811 = vmax.f32 %v747, %v779
        %v812 = vmax.f32 %v748, %v782
        %v813 = vmax.f32 %v749, %v785
        %v814 = vmax.f32 %v750, %v788
        %v815 = vmax.f32 %v751, %v791
        %v816 = vmax.f32 %v752, %v794
        %v817 = vmax.f32 %v753, %v797
        %v818 = vmax.f32 %v754, %v800
        %v819 = vmax.f32 %v755, %v803
        %v820 = vsub.f32 %v740, %v804
        %v821 = vsub.f32 %v741, %v805
        %v822 = vsub.f32 %v742, %v806
        %v823 = vsub.f32 %v743, %v807
        %v824 = vsub.f32 %v744, %v808
        %v825 = vsub.f32 %v745, %v809
        %v826 = vsub.f32 %v746, %v810
        %v827 = vsub.f32 %v747, %v811
        %v828 = vsub.f32 %v748, %v812
        %v829 = vsub.f32 %v749, %v813
        %v830 = vsub.f32 %v750, %v814
        %v831 = vsub.f32 %v751, %v815
        %v832 = vsub.f32 %v752, %v816
        %v833 = vsub.f32 %v753, %v817
        %v834 = vsub.f32 %v754, %v818
        %v835 = vsub.f32 %v755, %v819
        %v836 = vmul.f32 %v820, 1.442695
        %v837 = vpow.pop %v836
        %v838 = vmul.f32 %v821, 1.442695
        %v839 = vpow.pop %v838
        %v840 = vmul.f32 %v822, 1.442695
        %v841 = vpow.pop %v840
        %v842 = vmul.f32 %v823, 1.442695
        %v843 = vpow.pop %v842
        %v844 = vmul.f32 %v824, 1.442695
        %v845 = vpow.pop %v844
        %v846 = vmul.f32 %v825, 1.442695
        %v847 = vpow.pop %v846
        %v848 = vmul.f32 %v826, 1.442695
        %v849 = vpow.pop %v848
        %v850 = vmul.f32 %v827, 1.442695
        %v851 = vpow.pop %v850
        %v852 = vmul.f32 %v828, 1.442695
        %v853 = vpow.pop %v852
        %v854 = vmul.f32 %v829, 1.442695
        %v855 = vpow.pop %v854
        %v856 = vmul.f32 %v830, 1.442695
        %v857 = vpow.pop %v856
        %v858 = vmul.f32 %v831, 1.442695
        %v859 = vpow.pop %v858
        %v860 = vmul.f32 %v832, 1.442695
        %v861 = vpow.pop %v860
        %v862 = vmul.f32 %v833, 1.442695
        %v863 = vpow.pop %v862
        %v864 = vmul.f32 %v834, 1.442695
        %v865 = vpow.pop %v864
        %v866 = vmul.f32 %v835, 1.442695
        %v867 = vpow.pop %v866
        %869 = vset.pattern.permute.xlu0 0
        %870 = vperm.xlu0 %869, %v804
        %v871 = vpop.permute.xlu0 %870
        %874 = vset.pattern.permute.xlu0 0
        %875 = vperm.xlu0 %874, %v805
        %v876 = vpop.permute.xlu0 %875
        %879 = vset.pattern.permute.xlu0 0
        %880 = vperm.xlu0 %879, %v806
        %v881 = vpop.permute.xlu0 %880
        %884 = vset.pattern.permute.xlu0 0
        %885 = vperm.xlu0 %884, %v807
        %v886 = vpop.permute.xlu0 %885
        %889 = vset.pattern.permute.xlu0 0
        %890 = vperm.xlu0 %889, %v808
        %v891 = vpop.permute.xlu0 %890
        %894 = vset.pattern.permute.xlu0 0
        %895 = vperm.xlu0 %894, %v809
        %v896 = vpop.permute.xlu0 %895
        %899 = vset.pattern.permute.xlu0 0
        %900 = vperm.xlu0 %899, %v810
        %v901 = vpop.permute.xlu0 %900
        %904 = vset.pattern.permute.xlu0 0
        %905 = vperm.xlu0 %904, %v811
        %v906 = vpop.permute.xlu0 %905
        %909 = vset.pattern.permute.xlu0 0
        %910 = vperm.xlu0 %909, %v812
        %v911 = vpop.permute.xlu0 %910
        %914 = vset.pattern.permute.xlu0 0
        %915 = vperm.xlu0 %914, %v813
        %v916 = vpop.permute.xlu0 %915
        %919 = vset.pattern.permute.xlu0 0
        %920 = vperm.xlu0 %919, %v814
        %v921 = vpop.permute.xlu0 %920
        %924 = vset.pattern.permute.xlu0 0
        %925 = vperm.xlu0 %924, %v815
        %v926 = vpop.permute.xlu0 %925
        %929 = vset.pattern.permute.xlu0 0
        %930 = vperm.xlu0 %929, %v816
        %v931 = vpop.permute.xlu0 %930
        %934 = vset.pattern.permute.xlu0 0
        %935 = vperm.xlu0 %934, %v817
        %v936 = vpop.permute.xlu0 %935
        %939 = vset.pattern.permute.xlu0 0
        %940 = vperm.xlu0 %939, %v818
        %v941 = vpop.permute.xlu0 %940
        %944 = vset.pattern.permute.xlu0 0
        %945 = vperm.xlu0 %944, %v819
        %v946 = vpop.permute.xlu0 %945
        %v948 = vsub.f32 %v708, %v871
        %v949 = vsub.f32 %v709, %v871
        %v950 = vsub.f32 %v710, %v876
        %v951 = vsub.f32 %v711, %v876
        %v952 = vsub.f32 %v712, %v881
        %v953 = vsub.f32 %v713, %v881
        %v954 = vsub.f32 %v714, %v886
        %v955 = vsub.f32 %v715, %v886
        %v956 = vsub.f32 %v716, %v891
        %v957 = vsub.f32 %v717, %v891
        %v958 = vsub.f32 %v718, %v896
        %v959 = vsub.f32 %v719, %v896
        %v960 = vsub.f32 %v720, %v901
        %v961 = vsub.f32 %v721, %v901
        %v962 = vsub.f32 %v722, %v906
        %v963 = vsub.f32 %v723, %v906
        %v964 = vsub.f32 %v724, %v911
        %v965 = vsub.f32 %v725, %v911
        %v966 = vsub.f32 %v726, %v916
        %v967 = vsub.f32 %v727, %v916
        %v968 = vsub.f32 %v728, %v921
        %v969 = vsub.f32 %v729, %v921
        %v970 = vsub.f32 %v730, %v926
        %v971 = vsub.f32 %v731, %v926
        %v972 = vsub.f32 %v732, %v931
        %v973 = vsub.f32 %v733, %v931
        %v974 = vsub.f32 %v734, %v936
        %v975 = vsub.f32 %v735, %v936
        %v976 = vsub.f32 %v736, %v941
        %v977 = vsub.f32 %v737, %v941
        %v978 = vsub.f32 %v738, %v946
        %v979 = vsub.f32 %v739, %v946
        %v980 = vmul.f32 %v948, 1.442695
        %v981 = vpow.pop %v980
        %v982 = vmul.f32 %v949, 1.442695
        %v983 = vpow.pop %v982
        %v984 = vmul.f32 %v950, 1.442695
        %v985 = vpow.pop %v984
        %v986 = vmul.f32 %v951, 1.442695
        %v987 = vpow.pop %v986
        %v988 = vmul.f32 %v952, 1.442695
        %v989 = vpow.pop %v988
        %v990 = vmul.f32 %v953, 1.442695
        %v991 = vpow.pop %v990
        %v992 = vmul.f32 %v954, 1.442695
        %v993 = vpow.pop %v992
        %v994 = vmul.f32 %v955, 1.442695
        %v995 = vpow.pop %v994
        %v996 = vmul.f32 %v956, 1.442695
        %v997 = vpow.pop %v996
        %v998 = vmul.f32 %v957, 1.442695
        %v999 = vpow.pop %v998
        %v1000 = vmul.f32 %v958, 1.442695
        %v1001 = vpow.pop %v1000
        %v1002 = vmul.f32 %v959, 1.442695
        %v1003 = vpow.pop %v1002
        %v1004 = vmul.f32 %v960, 1.442695
        %v1005 = vpow.pop %v1004
        %v1006 = vmul.f32 %v961, 1.442695
        %v1007 = vpow.pop %v1006
        %v1008 = vmul.f32 %v962, 1.442695
        %v1009 = vpow.pop %v1008
        %v1010 = vmul.f32 %v963, 1.442695
        %v1011 = vpow.pop %v1010
        %v1012 = vmul.f32 %v964, 1.442695
        %v1013 = vpow.pop %v1012
        %v1014 = vmul.f32 %v965, 1.442695
        %v1015 = vpow.pop %v1014
        %v1016 = vmul.f32 %v966, 1.442695
        %v1017 = vpow.pop %v1016
        %v1018 = vmul.f32 %v967, 1.442695
        %v1019 = vpow.pop %v1018
        %v1020 = vmul.f32 %v968, 1.442695
        %v1021 = vpow.pop %v1020
        %v1022 = vmul.f32 %v969, 1.442695
        %v1023 = vpow.pop %v1022
        %v1024 = vmul.f32 %v970, 1.442695
        %v1025 = vpow.pop %v1024
        %v1026 = vmul.f32 %v971, 1.442695
        %v1027 = vpow.pop %v1026
        %v1028 = vmul.f32 %v972, 1.442695
        %v1029 = vpow.pop %v1028
        %v1030 = vmul.f32 %v973, 1.442695
        %v1031 = vpow.pop %v1030
        %v1032 = vmul.f32 %v974, 1.442695
        %v1033 = vpow.pop %v1032
        %v1034 = vmul.f32 %v975, 1.442695
        %v1035 = vpow.pop %v1034
        %v1036 = vmul.f32 %v976, 1.442695
        %v1037 = vpow.pop %v1036
        %v1038 = vmul.f32 %v977, 1.442695
        %v1039 = vpow.pop %v1038
        %v1040 = vmul.f32 %v978, 1.442695
        %v1041 = vpow.pop %v1040
        %v1042 = vmul.f32 %v979, 1.442695
        %v1043 = vpow.pop %v1042
        %v1044 = vsel %vm676, %v981, 0.0
        %v1045 = vsel %vm677, %v983, 0.0
        %v1046 = vsel %vm678, %v985, 0.0
        %v1047 = vsel %vm679, %v987, 0.0
        %v1048 = vsel %vm680, %v989, 0.0
        %v1049 = vsel %vm681, %v991, 0.0
        %v1050 = vsel %vm682, %v993, 0.0
        %v1051 = vsel %vm683, %v995, 0.0
        %v1052 = vsel %vm684, %v997, 0.0
        %v1053 = vsel %vm685, %v999, 0.0
        %v1054 = vsel %vm686, %v1001, 0.0
        %v1055 = vsel %vm687, %v1003, 0.0
        %v1056 = vsel %vm688, %v1005, 0.0
        %v1057 = vsel %vm689, %v1007, 0.0
        %v1058 = vsel %vm690, %v1009, 0.0
        %v1059 = vsel %vm691, %v1011, 0.0
        %v1060 = vsel %vm692, %v1013, 0.0
        %v1061 = vsel %vm693, %v1015, 0.0
        %v1062 = vsel %vm694, %v1017, 0.0
        %v1063 = vsel %vm695, %v1019, 0.0
        %v1064 = vsel %vm696, %v1021, 0.0
        %v1065 = vsel %vm697, %v1023, 0.0
        %v1066 = vsel %vm698, %v1025, 0.0
        %v1067 = vsel %vm699, %v1027, 0.0
        %v1068 = vsel %vm700, %v1029, 0.0
        %v1069 = vsel %vm701, %v1031, 0.0
        %v1070 = vsel %vm702, %v1033, 0.0
        %v1071 = vsel %vm703, %v1035, 0.0
        %v1072 = vsel %vm704, %v1037, 0.0
        %v1073 = vsel %vm705, %v1039, 0.0
        %v1074 = vsel %vm706, %v1041, 0.0
        %v1075 = vsel %vm707, %v1043, 0.0
        %v1076 = vld [vmem:[#allocation3] sm:$0xff]
        %v1077 = vld [vmem:[#allocation3 + $0x8] sm:$0xff]
        %v1078 = vld [vmem:[#allocation3 + $0x10] sm:$0xff]
        %v1079 = vld [vmem:[#allocation3 + $0x18] sm:$0xff]
        %v1080 = vld [vmem:[#allocation3 + $0x20] sm:$0xff]
        %v1081 = vld [vmem:[#allocation3 + $0x28] sm:$0xff]
        %v1082 = vld [vmem:[#allocation3 + $0x30] sm:$0xff]
        %v1083 = vld [vmem:[#allocation3 + $0x38] sm:$0xff]
        %v1084 = vld [vmem:[#allocation3 + $0x40] sm:$0xff]
        %v1085 = vld [vmem:[#allocation3 + $0x48] sm:$0xff]
        %v1086 = vld [vmem:[#allocation3 + $0x50] sm:$0xff]
        %v1087 = vld [vmem:[#allocation3 + $0x58] sm:$0xff]
        %v1088 = vld [vmem:[#allocation3 + $0x60] sm:$0xff]
        %v1089 = vld [vmem:[#allocation3 + $0x68] sm:$0xff]
        %v1090 = vld [vmem:[#allocation3 + $0x70] sm:$0xff]
        %v1091 = vld [vmem:[#allocation3 + $0x78] sm:$0xff]
        %v1092 = vmul.f32 %v837, %v1076
        %v1093 = vmul.f32 %v839, %v1077
        %v1094 = vmul.f32 %v841, %v1078
        %v1095 = vmul.f32 %v843, %v1079
        %v1096 = vmul.f32 %v845, %v1080
        %v1097 = vmul.f32 %v847, %v1081
        %v1098 = vmul.f32 %v849, %v1082
        %v1099 = vmul.f32 %v851, %v1083
        %v1100 = vmul.f32 %v853, %v1084
        %v1101 = vmul.f32 %v855, %v1085
        %v1102 = vmul.f32 %v857, %v1086
        %v1103 = vmul.f32 %v859, %v1087
        %v1104 = vmul.f32 %v861, %v1088
        %v1105 = vmul.f32 %v863, %v1089
        %v1106 = vmul.f32 %v865, %v1090
        %v1107 = vmul.f32 %v867, %v1091
        %v1108 = vadd.f32 %v1044, %v1045
        %1109 = vadd.xlane.f32.xlu0 %v1108
        %v1110 = vpop.xlane.xlu0 %1109
        %v1111 = vadd.f32 %v1046, %v1047
        %1112 = vadd.xlane.f32.xlu0 %v1111
        %v1113 = vpop.xlane.xlu0 %1112
        %v1114 = vadd.f32 %v1048, %v1049
        %1115 = vadd.xlane.f32.xlu0 %v1114
        %v1116 = vpop.xlane.xlu0 %1115
        %v1117 = vadd.f32 %v1050, %v1051
        %1118 = vadd.xlane.f32.xlu0 %v1117
        %v1119 = vpop.xlane.xlu0 %1118
        %v1120 = vadd.f32 %v1052, %v1053
        %1121 = vadd.xlane.f32.xlu0 %v1120
        %v1122 = vpop.xlane.xlu0 %1121
        %v1123 = vadd.f32 %v1054, %v1055
        %1124 = vadd.xlane.f32.xlu0 %v1123
        %v1125 = vpop.xlane.xlu0 %1124
        %v1126 = vadd.f32 %v1056, %v1057
        %1127 = vadd.xlane.f32.xlu0 %v1126
        %v1128 = vpop.xlane.xlu0 %1127
        %v1129 = vadd.f32 %v1058, %v1059
        %1130 = vadd.xlane.f32.xlu0 %v1129
        %v1131 = vpop.xlane.xlu0 %1130
        %v1132 = vadd.f32 %v1060, %v1061
        %1133 = vadd.xlane.f32.xlu0 %v1132
        %v1134 = vpop.xlane.xlu0 %1133
        %v1135 = vadd.f32 %v1062, %v1063
        %1136 = vadd.xlane.f32.xlu0 %v1135
        %v1137 = vpop.xlane.xlu0 %1136
        %v1138 = vadd.f32 %v1064, %v1065
        %1139 = vadd.xlane.f32.xlu0 %v1138
        %v1140 = vpop.xlane.xlu0 %1139
        %v1141 = vadd.f32 %v1066, %v1067
        %1142 = vadd.xlane.f32.xlu0 %v1141
        %v1143 = vpop.xlane.xlu0 %1142
        %v1144 = vadd.f32 %v1068, %v1069
        %1145 = vadd.xlane.f32.xlu0 %v1144
        %v1146 = vpop.xlane.xlu0 %1145
        %v1147 = vadd.f32 %v1070, %v1071
        %1148 = vadd.xlane.f32.xlu0 %v1147
        %v1149 = vpop.xlane.xlu0 %1148
        %v1150 = vadd.f32 %v1072, %v1073
        %1151 = vadd.xlane.f32.xlu0 %v1150
        %v1152 = vpop.xlane.xlu0 %1151
        %v1153 = vadd.f32 %v1074, %v1075
        %1154 = vadd.xlane.f32.xlu0 %v1153
        %v1155 = vpop.xlane.xlu0 %1154
        %v1156 = vadd.f32 %v1092, %v1110
        %v1157 = vadd.f32 %v1093, %v1113
        %v1158 = vadd.f32 %v1094, %v1116
        %v1159 = vadd.f32 %v1095, %v1119
        %v1160 = vadd.f32 %v1096, %v1122
        %v1161 = vadd.f32 %v1097, %v1125
        %v1162 = vadd.f32 %v1098, %v1128
        %v1163 = vadd.f32 %v1099, %v1131
        %v1164 = vadd.f32 %v1100, %v1134
        %v1165 = vadd.f32 %v1101, %v1137
        %v1166 = vadd.f32 %v1102, %v1140
        %v1167 = vadd.f32 %v1103, %v1143
        %v1168 = vadd.f32 %v1104, %v1146
        %v1169 = vadd.f32 %v1105, %v1149
        %v1170 = vadd.f32 %v1106, %v1152
        %v1171 = vadd.f32 %v1107, %v1155
        %vm1172 = vcmask 7168
        %1173 = vst.msk [vmem:[#allocation3] sm:$0xff] %vm1172, %v1156
        %1174 = vst.msk [vmem:[#allocation3 + $0x8] sm:$0xff] %vm1172, %v1157
        %1175 = vst.msk [vmem:[#allocation3 + $0x10] sm:$0xff] %vm1172, %v1158
        %1176 = vst.msk [vmem:[#allocation3 + $0x18] sm:$0xff] %vm1172, %v1159
        %1177 = vst.msk [vmem:[#allocation3 + $0x20] sm:$0xff] %vm1172, %v1160
        %1178 = vst.msk [vmem:[#allocation3 + $0x28] sm:$0xff] %vm1172, %v1161
        %1179 = vst.msk [vmem:[#allocation3 + $0x30] sm:$0xff] %vm1172, %v1162
        %1180 = vst.msk [vmem:[#allocation3 + $0x38] sm:$0xff] %vm1172, %v1163
        %1181 = vst.msk [vmem:[#allocation3 + $0x40] sm:$0xff] %vm1172, %v1164
        %1182 = vst.msk [vmem:[#allocation3 + $0x48] sm:$0xff] %vm1172, %v1165
        %1183 = vst.msk [vmem:[#allocation3 + $0x50] sm:$0xff] %vm1172, %v1166
        %1184 = vst.msk [vmem:[#allocation3 + $0x58] sm:$0xff] %vm1172, %v1167
        %1185 = vst.msk [vmem:[#allocation3 + $0x60] sm:$0xff] %vm1172, %v1168
        %1186 = vst.msk [vmem:[#allocation3 + $0x68] sm:$0xff] %vm1172, %v1169
        %1187 = vst.msk [vmem:[#allocation3 + $0x70] sm:$0xff] %vm1172, %v1170
        %1188 = vst.msk [vmem:[#allocation3 + $0x78] sm:$0xff] %vm1172, %v1171
        %v1189 = vld [vmem:[#allocation4] sm:$0xff]
        %v1190 = vld [vmem:[#allocation4 + $0x8] sm:$0xff]
        %v1191 = vld [vmem:[#allocation4 + $0x10] sm:$0xff]
        %v1192 = vld [vmem:[#allocation4 + $0x18] sm:$0xff]
        %v1193 = vld [vmem:[#allocation4 + $0x20] sm:$0xff]
        %v1194 = vld [vmem:[#allocation4 + $0x28] sm:$0xff]
        %v1195 = vld [vmem:[#allocation4 + $0x30] sm:$0xff]
        %v1196 = vld [vmem:[#allocation4 + $0x38] sm:$0xff]
        %v1197 = vld [vmem:[#allocation4 + $0x40] sm:$0xff]
        %v1198 = vld [vmem:[#allocation4 + $0x48] sm:$0xff]
        %v1199 = vld [vmem:[#allocation4 + $0x50] sm:$0xff]
        %v1200 = vld [vmem:[#allocation4 + $0x58] sm:$0xff]
        %v1201 = vld [vmem:[#allocation4 + $0x60] sm:$0xff]
        %v1202 = vld [vmem:[#allocation4 + $0x68] sm:$0xff]
        %v1203 = vld [vmem:[#allocation4 + $0x70] sm:$0xff]
        %v1204 = vld [vmem:[#allocation4 + $0x78] sm:$0xff]
        %1206 = vset.pattern.permute.xlu0 0
        %1207 = vperm.xlu0 %1206, %v837
        %v1208 = vpop.permute.xlu0 %1207
        %1211 = vset.pattern.permute.xlu0 0
        %1212 = vperm.xlu0 %1211, %v839
        %v1213 = vpop.permute.xlu0 %1212
        %1216 = vset.pattern.permute.xlu0 0
        %1217 = vperm.xlu0 %1216, %v841
        %v1218 = vpop.permute.xlu0 %1217
        %1221 = vset.pattern.permute.xlu0 0
        %1222 = vperm.xlu0 %1221, %v843
        %v1223 = vpop.permute.xlu0 %1222
        %1226 = vset.pattern.permute.xlu0 0
        %1227 = vperm.xlu0 %1226, %v845
        %v1228 = vpop.permute.xlu0 %1227
        %1231 = vset.pattern.permute.xlu0 0
        %1232 = vperm.xlu0 %1231, %v847
        %v1233 = vpop.permute.xlu0 %1232
        %1236 = vset.pattern.permute.xlu0 0
        %1237 = vperm.xlu0 %1236, %v849
        %v1238 = vpop.permute.xlu0 %1237
        %1241 = vset.pattern.permute.xlu0 0
        %1242 = vperm.xlu0 %1241, %v851
        %v1243 = vpop.permute.xlu0 %1242
        %1246 = vset.pattern.permute.xlu0 0
        %1247 = vperm.xlu0 %1246, %v853
        %v1248 = vpop.permute.xlu0 %1247
        %1251 = vset.pattern.permute.xlu0 0
        %1252 = vperm.xlu0 %1251, %v855
        %v1253 = vpop.permute.xlu0 %1252
        %1256 = vset.pattern.permute.xlu0 0
        %1257 = vperm.xlu0 %1256, %v857
        %v1258 = vpop.permute.xlu0 %1257
        %1261 = vset.pattern.permute.xlu0 0
        %1262 = vperm.xlu0 %1261, %v859
        %v1263 = vpop.permute.xlu0 %1262
        %1266 = vset.pattern.permute.xlu0 0
        %1267 = vperm.xlu0 %1266, %v861
        %v1268 = vpop.permute.xlu0 %1267
        %1271 = vset.pattern.permute.xlu0 0
        %1272 = vperm.xlu0 %1271, %v863
        %v1273 = vpop.permute.xlu0 %1272
        %1276 = vset.pattern.permute.xlu0 0
        %1277 = vperm.xlu0 %1276, %v865
        %v1278 = vpop.permute.xlu0 %1277
        %1281 = vset.pattern.permute.xlu0 0
        %1282 = vperm.xlu0 %1281, %v867
        %v1283 = vpop.permute.xlu0 %1282
        %v1285 = vmul.f32 %v1208, %v1189
        %v1286 = vmul.f32 %v1213, %v1190
        %v1287 = vmul.f32 %v1218, %v1191
        %v1288 = vmul.f32 %v1223, %v1192
        %v1289 = vmul.f32 %v1228, %v1193
        %v1290 = vmul.f32 %v1233, %v1194
        %v1291 = vmul.f32 %v1238, %v1195
        %v1292 = vmul.f32 %v1243, %v1196
        %v1293 = vmul.f32 %v1248, %v1197
        %v1294 = vmul.f32 %v1253, %v1198
        %v1295 = vmul.f32 %v1258, %v1199
        %v1296 = vmul.f32 %v1263, %v1200
        %v1297 = vmul.f32 %v1268, %v1201
        %v1298 = vmul.f32 %v1273, %v1202
        %v1299 = vmul.f32 %v1278, %v1203
        %v1300 = vmul.f32 %v1283, %v1204
        %v1301 = vpack.c.bf16 %v1046, %v1044
        %v1302 = vpack.c.bf16 %v1047, %v1045
        %v1303 = vpack.c.bf16 %v1050, %v1048
        %v1304 = vpack.c.bf16 %v1051, %v1049
        %v1305 = vpack.c.bf16 %v1054, %v1052
        %v1306 = vpack.c.bf16 %v1055, %v1053
        %v1307 = vpack.c.bf16 %v1058, %v1056
        %v1308 = vpack.c.bf16 %v1059, %v1057
        %v1309 = vpack.c.bf16 %v1062, %v1060
        %v1310 = vpack.c.bf16 %v1063, %v1061
        %v1311 = vpack.c.bf16 %v1066, %v1064
        %v1312 = vpack.c.bf16 %v1067, %v1065
        %v1313 = vpack.c.bf16 %v1070, %v1068
        %v1314 = vpack.c.bf16 %v1071, %v1069
        %v1315 = vpack.c.bf16 %v1074, %v1072
        %v1316 = vpack.c.bf16 %v1075, %v1073
        %s1317 = smul.u32 %s23, 256
        %s1318 = sshra.s32 %s1317, 3
        %s1319 = sand.u32 %s1317, 7
        %s1320 = smul.addr %s1318, 4
        %s1321 = scalar_lea.vmem %s2, %s1320
        %v1322 = vld [vmem:[%s1321] sm:$0xf]
        %v1323 = vld [vmem:[%s1321 + $0x4] sm:$0xf]
        %v1324 = vld [vmem:[%s1321 + $0x8] sm:$0xf]
        %v1325 = vld [vmem:[%s1321 + $0xc] sm:$0xf]
        %v1326 = vld [vmem:[%s1321 + $0x10] sm:$0xf]
        %v1327 = vld [vmem:[%s1321 + $0x14] sm:$0xf]
        %v1328 = vld [vmem:[%s1321 + $0x18] sm:$0xf]
        %v1329 = vld [vmem:[%s1321 + $0x1c] sm:$0xf]
        %v1330 = vld [vmem:[%s1321 + $0x20] sm:$0xf]
        %v1331 = vld [vmem:[%s1321 + $0x24] sm:$0xf]
        %v1332 = vld [vmem:[%s1321 + $0x28] sm:$0xf]
        %v1333 = vld [vmem:[%s1321 + $0x2c] sm:$0xf]
        %v1334 = vld [vmem:[%s1321 + $0x30] sm:$0xf]
        %v1335 = vld [vmem:[%s1321 + $0x34] sm:$0xf]
        %v1336 = vld [vmem:[%s1321 + $0x38] sm:$0xf]
        %v1337 = vld [vmem:[%s1321 + $0x3c] sm:$0xf]
        %v1338 = vld [vmem:[%s1321 + $0x40] sm:$0xf]
        %v1339 = vld [vmem:[%s1321 + $0x44] sm:$0xf]
        %v1340 = vld [vmem:[%s1321 + $0x48] sm:$0xf]
        %v1341 = vld [vmem:[%s1321 + $0x4c] sm:$0xf]
        %v1342 = vld [vmem:[%s1321 + $0x50] sm:$0xf]
        %v1343 = vld [vmem:[%s1321 + $0x54] sm:$0xf]
        %v1344 = vld [vmem:[%s1321 + $0x58] sm:$0xf]
        %v1345 = vld [vmem:[%s1321 + $0x5c] sm:$0xf]
        %v1346 = vld [vmem:[%s1321 + $0x60] sm:$0xf]
        %v1347 = vld [vmem:[%s1321 + $0x64] sm:$0xf]
        %v1348 = vld [vmem:[%s1321 + $0x68] sm:$0xf]
        %v1349 = vld [vmem:[%s1321 + $0x6c] sm:$0xf]
        %v1350 = vld [vmem:[%s1321 + $0x70] sm:$0xf]
        %v1351 = vld [vmem:[%s1321 + $0x74] sm:$0xf]
        %v1352 = vld [vmem:[%s1321 + $0x78] sm:$0xf]
        %v1353 = vld [vmem:[%s1321 + $0x7c] sm:$0xf]
        %v1386 = vunpack.c.l.b16 %v1322
        %v1387 = vunpack.c.l.b16 %v1323
        %v1388 = vunpack.c.l.b16 %v1324
        %v1389 = vunpack.c.l.b16 %v1325
        %v1390 = vunpack.c.l.b16 %v1326
        %v1391 = vunpack.c.l.b16 %v1327
        %v1392 = vunpack.c.l.b16 %v1328
        %v1393 = vunpack.c.l.b16 %v1329
        %v1394 = vunpack.c.l.b16 %v1330
        %v1395 = vunpack.c.l.b16 %v1331
        %v1396 = vunpack.c.l.b16 %v1332
        %v1397 = vunpack.c.l.b16 %v1333
        %v1398 = vunpack.c.l.b16 %v1334
        %v1399 = vunpack.c.l.b16 %v1335
        %v1400 = vunpack.c.l.b16 %v1336
        %v1401 = vunpack.c.l.b16 %v1337
        %v1402 = vunpack.c.l.b16 %v1338
        %v1403 = vunpack.c.l.b16 %v1339
        %v1404 = vunpack.c.l.b16 %v1340
        %v1405 = vunpack.c.l.b16 %v1341
        %v1406 = vunpack.c.l.b16 %v1342
        %v1407 = vunpack.c.l.b16 %v1343
        %v1408 = vunpack.c.l.b16 %v1344
        %v1409 = vunpack.c.l.b16 %v1345
        %v1410 = vunpack.c.l.b16 %v1346
        %v1411 = vunpack.c.l.b16 %v1347
        %v1412 = vunpack.c.l.b16 %v1348
        %v1413 = vunpack.c.l.b16 %v1349
        %v1414 = vunpack.c.l.b16 %v1350
        %v1415 = vunpack.c.l.b16 %v1351
        %v1416 = vunpack.c.l.b16 %v1352
        %v1417 = vunpack.c.l.b16 %v1353
        %v1418 = vpack.c.b16 %v1387, %v1386
        %v1419 = vpack.c.b16 %v1389, %v1388
        %v1420 = vpack.c.b16 %v1391, %v1390
        %v1421 = vpack.c.b16 %v1393, %v1392
        %v1422 = vpack.c.b16 %v1395, %v1394
        %v1423 = vpack.c.b16 %v1397, %v1396
        %v1424 = vpack.c.b16 %v1399, %v1398
        %v1425 = vpack.c.b16 %v1401, %v1400
        %v1426 = vpack.c.b16 %v1403, %v1402
        %v1427 = vpack.c.b16 %v1405, %v1404
        %v1428 = vpack.c.b16 %v1407, %v1406
        %v1429 = vpack.c.b16 %v1409, %v1408
        %v1430 = vpack.c.b16 %v1411, %v1410
        %v1431 = vpack.c.b16 %v1413, %v1412
        %v1432 = vpack.c.b16 %v1415, %v1414
        %v1433 = vpack.c.b16 %v1417, %v1416
        %1450 = vmatpush.bf16.msra.mxu0 %v1425
        %1451 = vmatpush.bf16.msra.mxu0 %v1424
        %1452 = vmatpush.bf16.msra.mxu0 %v1423
        %1453 = vmatpush.bf16.msra.mxu0 %v1422
        %1454 = vmatpush.bf16.msra.mxu0 %v1421
        %1455 = vmatpush.bf16.msra.mxu0 %v1420
        %1456 = vmatpush.bf16.msra.mxu0 %v1419
        %1457 = vmatpush.bf16.msra.mxu0 %v1418
        %1458 = vmatmul.bf16.gmra.mxu0 %v1301
        %v1459 = vpop.f32.mrf.mxu0
        %v1460 = vadd.f32 0.0, %v1459
        %v1461 = vpop.f32.mrf.mxu0
        %v1462 = vadd.f32 0.0, %v1461
        %1463 = vmatmul.bf16.gmra.mxu0 %v1303
        %v1464 = vpop.f32.mrf.mxu0
        %v1465 = vadd.f32 0.0, %v1464
        %v1466 = vpop.f32.mrf.mxu0
        %v1467 = vadd.f32 0.0, %v1466
        %1468 = vmatmul.bf16.gmra.mxu0 %v1305
        %v1469 = vpop.f32.mrf.mxu0
        %v1470 = vadd.f32 0.0, %v1469
        %v1471 = vpop.f32.mrf.mxu0
        %v1472 = vadd.f32 0.0, %v1471
        %1473 = vmatmul.bf16.gmra.mxu0 %v1307
        %v1474 = vpop.f32.mrf.mxu0
        %v1475 = vadd.f32 0.0, %v1474
        %v1476 = vpop.f32.mrf.mxu0
        %v1477 = vadd.f32 0.0, %v1476
        %1478 = vmatmul.bf16.gmra.mxu0 %v1309
        %v1479 = vpop.f32.mrf.mxu0
        %v1480 = vadd.f32 0.0, %v1479
        %v1481 = vpop.f32.mrf.mxu0
        %v1482 = vadd.f32 0.0, %v1481
        %1483 = vmatmul.bf16.gmra.mxu0 %v1311
        %v1484 = vpop.f32.mrf.mxu0
        %v1485 = vadd.f32 0.0, %v1484
        %v1486 = vpop.f32.mrf.mxu0
        %v1487 = vadd.f32 0.0, %v1486
        %1488 = vmatmul.bf16.gmra.mxu0 %v1313
        %v1489 = vpop.f32.mrf.mxu0
        %v1490 = vadd.f32 0.0, %v1489
        %v1491 = vpop.f32.mrf.mxu0
        %v1492 = vadd.f32 0.0, %v1491
        %1493 = vmatmul.bf16.gmra.mxu0 %v1315
        %v1494 = vpop.f32.mrf.mxu0
        %v1495 = vadd.f32 0.0, %v1494
        %v1496 = vpop.f32.mrf.mxu0
        %v1497 = vadd.f32 0.0, %v1496
        %1498 = vdwg.mxu0
        %1499 = vmatpush.bf16.msra.mxu0 %v1433
        %1500 = vmatpush.bf16.msra.mxu0 %v1432
        %1501 = vmatpush.bf16.msra.mxu0 %v1431
        %1502 = vmatpush.bf16.msra.mxu0 %v1430
        %1503 = vmatpush.bf16.msra.mxu0 %v1429
        %1504 = vmatpush.bf16.msra.mxu0 %v1428
        %1505 = vmatpush.bf16.msra.mxu0 %v1427
        %1506 = vmatpush.bf16.msra.mxu0 %v1426
        %1507 = vmatmul.bf16.gmra.mxu0 %v1302
        %v1508 = vpop.f32.mrf.mxu0
        %v1509 = vadd.f32 %v1460, %v1508
        %v1510 = vpop.f32.mrf.mxu0
        %v1511 = vadd.f32 %v1462, %v1510
        %1512 = vmatmul.bf16.gmra.mxu0 %v1304
        %v1513 = vpop.f32.mrf.mxu0
        %v1514 = vadd.f32 %v1465, %v1513
        %v1515 = vpop.f32.mrf.mxu0
        %v1516 = vadd.f32 %v1467, %v1515
        %1517 = vmatmul.bf16.gmra.mxu0 %v1306
        %v1518 = vpop.f32.mrf.mxu0
        %v1519 = vadd.f32 %v1470, %v1518
        %v1520 = vpop.f32.mrf.mxu0
        %v1521 = vadd.f32 %v1472, %v1520
        %1522 = vmatmul.bf16.gmra.mxu0 %v1308
        %v1523 = vpop.f32.mrf.mxu0
        %v1524 = vadd.f32 %v1475, %v1523
        %v1525 = vpop.f32.mrf.mxu0
        %v1526 = vadd.f32 %v1477, %v1525
        %1527 = vmatmul.bf16.gmra.mxu0 %v1310
        %v1528 = vpop.f32.mrf.mxu0
        %v1529 = vadd.f32 %v1480, %v1528
        %v1530 = vpop.f32.mrf.mxu0
        %v1531 = vadd.f32 %v1482, %v1530
        %1532 = vmatmul.bf16.gmra.mxu0 %v1312
        %v1533 = vpop.f32.mrf.mxu0
        %v1534 = vadd.f32 %v1485, %v1533
        %v1535 = vpop.f32.mrf.mxu0
        %v1536 = vadd.f32 %v1487, %v1535
        %1537 = vmatmul.bf16.gmra.mxu0 %v1314
        %v1538 = vpop.f32.mrf.mxu0
        %v1539 = vadd.f32 %v1490, %v1538
        %v1540 = vpop.f32.mrf.mxu0
        %v1541 = vadd.f32 %v1492, %v1540
        %1542 = vmatmul.bf16.gmra.mxu0 %v1316
        %v1543 = vpop.f32.mrf.mxu0
        %v1544 = vadd.f32 %v1495, %v1543
        %v1545 = vpop.f32.mrf.mxu0
        %v1546 = vadd.f32 %v1497, %v1545
        %1547 = vdwg.mxu0
        %v1548 = vadd.f32 %v1285, %v1509
        %v1549 = vadd.f32 %v1286, %v1511
        %v1550 = vadd.f32 %v1287, %v1514
        %v1551 = vadd.f32 %v1288, %v1516
        %v1552 = vadd.f32 %v1289, %v1519
        %v1553 = vadd.f32 %v1290, %v1521
        %v1554 = vadd.f32 %v1291, %v1524
        %v1555 = vadd.f32 %v1292, %v1526
        %v1556 = vadd.f32 %v1293, %v1529
        %v1557 = vadd.f32 %v1294, %v1531
        %v1558 = vadd.f32 %v1295, %v1534
        %v1559 = vadd.f32 %v1296, %v1536
        %v1560 = vadd.f32 %v1297, %v1539
        %v1561 = vadd.f32 %v1298, %v1541
        %v1562 = vadd.f32 %v1299, %v1544
        %v1563 = vadd.f32 %v1300, %v1546
        %1564 = vst [vmem:[#allocation4] sm:$0xff] %v1548
        %1565 = vst [vmem:[#allocation4 + $0x8] sm:$0xff] %v1549
        %1566 = vst [vmem:[#allocation4 + $0x10] sm:$0xff] %v1550
        %1567 = vst [vmem:[#allocation4 + $0x18] sm:$0xff] %v1551
        %1568 = vst [vmem:[#allocation4 + $0x20] sm:$0xff] %v1552
        %1569 = vst [vmem:[#allocation4 + $0x28] sm:$0xff] %v1553
        %1570 = vst [vmem:[#allocation4 + $0x30] sm:$0xff] %v1554
        %1571 = vst [vmem:[#allocation4 + $0x38] sm:$0xff] %v1555
        %1572 = vst [vmem:[#allocation4 + $0x40] sm:$0xff] %v1556
        %1573 = vst [vmem:[#allocation4 + $0x48] sm:$0xff] %v1557
        %1574 = vst [vmem:[#allocation4 + $0x50] sm:$0xff] %v1558
        %1575 = vst [vmem:[#allocation4 + $0x58] sm:$0xff] %v1559
        %1576 = vst [vmem:[#allocation4 + $0x60] sm:$0xff] %v1560
        %1577 = vst [vmem:[#allocation4 + $0x68] sm:$0xff] %v1561
        %1578 = vst [vmem:[#allocation4 + $0x70] sm:$0xff] %v1562
        %1579 = vst [vmem:[#allocation4 + $0x78] sm:$0xff] %v1563
        %1580 = vst.msk [vmem:[#allocation2] sm:$0xff] %vm1172, %v804
        %1581 = vst.msk [vmem:[#allocation2 + $0x8] sm:$0xff] %vm1172, %v805
        %1582 = vst.msk [vmem:[#allocation2 + $0x10] sm:$0xff] %vm1172, %v806
        %1583 = vst.msk [vmem:[#allocation2 + $0x18] sm:$0xff] %vm1172, %v807
        %1584 = vst.msk [vmem:[#allocation2 + $0x20] sm:$0xff] %vm1172, %v808
        %1585 = vst.msk [vmem:[#allocation2 + $0x28] sm:$0xff] %vm1172, %v809
        %1586 = vst.msk [vmem:[#allocation2 + $0x30] sm:$0xff] %vm1172, %v810
        %1587 = vst.msk [vmem:[#allocation2 + $0x38] sm:$0xff] %vm1172, %v811
        %1588 = vst.msk [vmem:[#allocation2 + $0x40] sm:$0xff] %vm1172, %v812
        %1589 = vst.msk [vmem:[#allocation2 + $0x48] sm:$0xff] %vm1172, %v813
        %1590 = vst.msk [vmem:[#allocation2 + $0x50] sm:$0xff] %vm1172, %v814
        %1591 = vst.msk [vmem:[#allocation2 + $0x58] sm:$0xff] %vm1172, %v815
        %1592 = vst.msk [vmem:[#allocation2 + $0x60] sm:$0xff] %vm1172, %v816
        %1593 = vst.msk [vmem:[#allocation2 + $0x68] sm:$0xff] %vm1172, %v817
        %1594 = vst.msk [vmem:[#allocation2 + $0x70] sm:$0xff] %vm1172, %v818
        %1595 = vst.msk [vmem:[#allocation2 + $0x78] sm:$0xff] %vm1172, %v819
        // Predicated region
        $region41: #{tpu_custom_call.1} parent=35 // pred_check
          %p1596 = pneg %p273
        $region42: #{tpu_custom_call.1} parent=35 // pred_check_branch
          %1598 = sbr.rel (%p1596) target = $region44
        $region43: #{tpu_custom_call.1} parent=35 // pred_region
          %v1599 = vld [vmem:[#allocation3] sm:$0xff]
          %v1600 = vld [vmem:[#allocation3 + $0x8] sm:$0xff]
          %v1601 = vld [vmem:[#allocation3 + $0x10] sm:$0xff]
          %v1602 = vld [vmem:[#allocation3 + $0x18] sm:$0xff]
          %v1603 = vld [vmem:[#allocation3 + $0x20] sm:$0xff]
          %v1604 = vld [vmem:[#allocation3 + $0x28] sm:$0xff]
          %v1605 = vld [vmem:[#allocation3 + $0x30] sm:$0xff]
          %v1606 = vld [vmem:[#allocation3 + $0x38] sm:$0xff]
          %v1607 = vld [vmem:[#allocation3 + $0x40] sm:$0xff]
          %v1608 = vld [vmem:[#allocation3 + $0x48] sm:$0xff]
          %v1609 = vld [vmem:[#allocation3 + $0x50] sm:$0xff]
          %v1610 = vld [vmem:[#allocation3 + $0x58] sm:$0xff]
          %v1611 = vld [vmem:[#allocation3 + $0x60] sm:$0xff]
          %v1612 = vld [vmem:[#allocation3 + $0x68] sm:$0xff]
          %v1613 = vld [vmem:[#allocation3 + $0x70] sm:$0xff]
          %v1614 = vld [vmem:[#allocation3 + $0x78] sm:$0xff]
          %v1615 = vmax.f32 %v1599, 1e-30
          %v1616 = vmax.f32 %v1600, 1e-30
          %v1617 = vmax.f32 %v1601, 1e-30
          %v1618 = vmax.f32 %v1602, 1e-30
          %v1619 = vmax.f32 %v1603, 1e-30
          %v1620 = vmax.f32 %v1604, 1e-30
          %v1621 = vmax.f32 %v1605, 1e-30
          %v1622 = vmax.f32 %v1606, 1e-30
          %v1623 = vmax.f32 %v1607, 1e-30
          %v1624 = vmax.f32 %v1608, 1e-30
          %v1625 = vmax.f32 %v1609, 1e-30
          %v1626 = vmax.f32 %v1610, 1e-30
          %v1627 = vmax.f32 %v1611, 1e-30
          %v1628 = vmax.f32 %v1612, 1e-30
          %v1629 = vmax.f32 %v1613, 1e-30
          %v1630 = vmax.f32 %v1614, 1e-30
          %v1631 = vld [vmem:[#allocation4] sm:$0xff]
          %v1632 = vld [vmem:[#allocation4 + $0x8] sm:$0xff]
          %v1633 = vld [vmem:[#allocation4 + $0x10] sm:$0xff]
          %v1634 = vld [vmem:[#allocation4 + $0x18] sm:$0xff]
          %v1635 = vld [vmem:[#allocation4 + $0x20] sm:$0xff]
          %v1636 = vld [vmem:[#allocation4 + $0x28] sm:$0xff]
          %v1637 = vld [vmem:[#allocation4 + $0x30] sm:$0xff]
          %v1638 = vld [vmem:[#allocation4 + $0x38] sm:$0xff]
          %v1639 = vld [vmem:[#allocation4 + $0x40] sm:$0xff]
          %v1640 = vld [vmem:[#allocation4 + $0x48] sm:$0xff]
          %v1641 = vld [vmem:[#allocation4 + $0x50] sm:$0xff]
          %v1642 = vld [vmem:[#allocation4 + $0x58] sm:$0xff]
          %v1643 = vld [vmem:[#allocation4 + $0x60] sm:$0xff]
          %v1644 = vld [vmem:[#allocation4 + $0x68] sm:$0xff]
          %v1645 = vld [vmem:[#allocation4 + $0x70] sm:$0xff]
          %v1646 = vld [vmem:[#allocation4 + $0x78] sm:$0xff]
          %v1647 = vrcp.pop %v1615
          %v1648 = vrcp.pop %v1616
          %v1649 = vrcp.pop %v1617
          %v1650 = vrcp.pop %v1618
          %v1651 = vrcp.pop %v1619
          %v1652 = vrcp.pop %v1620
          %v1653 = vrcp.pop %v1621
          %v1654 = vrcp.pop %v1622
          %v1655 = vrcp.pop %v1623
          %v1656 = vrcp.pop %v1624
          %v1657 = vrcp.pop %v1625
          %v1658 = vrcp.pop %v1626
          %v1659 = vrcp.pop %v1627
          %v1660 = vrcp.pop %v1628
          %v1661 = vrcp.pop %v1629
          %v1662 = vrcp.pop %v1630
          %1664 = vset.pattern.permute.xlu0 0
          %1665 = vperm.xlu0 %1664, %v1647
          %v1666 = vpop.permute.xlu0 %1665
          %1669 = vset.pattern.permute.xlu0 0
          %1670 = vperm.xlu0 %1669, %v1648
          %v1671 = vpop.permute.xlu0 %1670
          %1674 = vset.pattern.permute.xlu0 0
          %1675 = vperm.xlu0 %1674, %v1649
          %v1676 = vpop.permute.xlu0 %1675
          %1679 = vset.pattern.permute.xlu0 0
          %1680 = vperm.xlu0 %1679, %v1650
          %v1681 = vpop.permute.xlu0 %1680
          %1684 = vset.pattern.permute.xlu0 0
          %1685 = vperm.xlu0 %1684, %v1651
          %v1686 = vpop.permute.xlu0 %1685
          %1689 = vset.pattern.permute.xlu0 0
          %1690 = vperm.xlu0 %1689, %v1652
          %v1691 = vpop.permute.xlu0 %1690
          %1694 = vset.pattern.permute.xlu0 0
          %1695 = vperm.xlu0 %1694, %v1653
          %v1696 = vpop.permute.xlu0 %1695
          %1699 = vset.pattern.permute.xlu0 0
          %1700 = vperm.xlu0 %1699, %v1654
          %v1701 = vpop.permute.xlu0 %1700
          %1704 = vset.pattern.permute.xlu0 0
          %1705 = vperm.xlu0 %1704, %v1655
          %v1706 = vpop.permute.xlu0 %1705
          %1709 = vset.pattern.permute.xlu0 0
          %1710 = vperm.xlu0 %1709, %v1656
          %v1711 = vpop.permute.xlu0 %1710
          %1714 = vset.pattern.permute.xlu0 0
          %1715 = vperm.xlu0 %1714, %v1657
          %v1716 = vpop.permute.xlu0 %1715
          %1719 = vset.pattern.permute.xlu0 0
          %1720 = vperm.xlu0 %1719, %v1658
          %v1721 = vpop.permute.xlu0 %1720
          %1724 = vset.pattern.permute.xlu0 0
          %1725 = vperm.xlu0 %1724, %v1659
          %v1726 = vpop.permute.xlu0 %1725
          %1729 = vset.pattern.permute.xlu0 0
          %1730 = vperm.xlu0 %1729, %v1660
          %v1731 = vpop.permute.xlu0 %1730
          %1734 = vset.pattern.permute.xlu0 0
          %1735 = vperm.xlu0 %1734, %v1661
          %v1736 = vpop.permute.xlu0 %1735
          %1739 = vset.pattern.permute.xlu0 0
          %1740 = vperm.xlu0 %1739, %v1662
          %v1741 = vpop.permute.xlu0 %1740
          %v1743 = vmul.f32 %v1631, %v1666
          %v1744 = vmul.f32 %v1632, %v1671
          %v1745 = vmul.f32 %v1633, %v1676
          %v1746 = vmul.f32 %v1634, %v1681
          %v1747 = vmul.f32 %v1635, %v1686
          %v1748 = vmul.f32 %v1636, %v1691
          %v1749 = vmul.f32 %v1637, %v1696
          %v1750 = vmul.f32 %v1638, %v1701
          %v1751 = vmul.f32 %v1639, %v1706
          %v1752 = vmul.f32 %v1640, %v1711
          %v1753 = vmul.f32 %v1641, %v1716
          %v1754 = vmul.f32 %v1642, %v1721
          %v1755 = vmul.f32 %v1643, %v1726
          %v1756 = vmul.f32 %v1644, %v1731
          %v1757 = vmul.f32 %v1645, %v1736
          %v1758 = vmul.f32 %v1646, %v1741
          %v1759 = vpack.c.bf16 %v1743, %v1743
          %v1760 = vpack.c.bf16 %v1744, %v1744
          %v1761 = vpack.c.bf16 %v1745, %v1745
          %v1762 = vpack.c.bf16 %v1746, %v1746
          %v1763 = vpack.c.bf16 %v1747, %v1747
          %v1764 = vpack.c.bf16 %v1748, %v1748
          %v1765 = vpack.c.bf16 %v1749, %v1749
          %v1766 = vpack.c.bf16 %v1750, %v1750
          %v1767 = vpack.c.bf16 %v1751, %v1751
          %v1768 = vpack.c.bf16 %v1752, %v1752
          %v1769 = vpack.c.bf16 %v1753, %v1753
          %v1770 = vpack.c.bf16 %v1754, %v1754
          %v1771 = vpack.c.bf16 %v1755, %v1755
          %v1772 = vpack.c.bf16 %v1756, %v1756
          %v1773 = vpack.c.bf16 %v1757, %v1757
          %v1774 = vpack.c.bf16 %v1758, %v1758
          %1775 = vst [vmem:[%s246] sm:$0xf] %v1759
          %1776 = vst [vmem:[%s246 + $0x4] sm:$0xf] %v1760
          %1777 = vst [vmem:[%s246 + $0x8] sm:$0xf] %v1761
          %1778 = vst [vmem:[%s246 + $0xc] sm:$0xf] %v1762
          %1779 = vst [vmem:[%s246 + $0x10] sm:$0xf] %v1763
          %1780 = vst [vmem:[%s246 + $0x14] sm:$0xf] %v1764
          %1781 = vst [vmem:[%s246 + $0x18] sm:$0xf] %v1765
          %1782 = vst [vmem:[%s246 + $0x1c] sm:$0xf] %v1766
          %1783 = vst [vmem:[%s246 + $0x20] sm:$0xf] %v1767
          %1784 = vst [vmem:[%s246 + $0x24] sm:$0xf] %v1768
          %1785 = vst [vmem:[%s246 + $0x28] sm:$0xf] %v1769
          %1786 = vst [vmem:[%s246 + $0x2c] sm:$0xf] %v1770
          %1787 = vst [vmem:[%s246 + $0x30] sm:$0xf] %v1771
          %1788 = vst [vmem:[%s246 + $0x34] sm:$0xf] %v1772
          %1789 = vst [vmem:[%s246 + $0x38] sm:$0xf] %v1773
          %1790 = vst [vmem:[%s246 + $0x3c] sm:$0xf] %v1774
        $region44: #{tpu_custom_call.1} parent=35 // pred_fallthru
          _
        %s1791 = sand.u32 %s139, 1
        %s1792 = scalar_lea.sflag [#allocation6], %s1791
        %s1793 = sand.u32 %s139, 1
        %s1794 = smul.addr %s1793, 64
        %s1795 = scalar_lea.vmem [#allocation5], %s1794
        // Predicated region
        $region45: #{tpu_custom_call.1} parent=35 // pred_check
          %p1796 = pneg %p149
        $region46: #{tpu_custom_call.1} parent=35 // pred_check_branch
          %1798 = sbr.rel (%p1796) target = $region48
        $region47: #{tpu_custom_call.1} parent=35 // pred_region
          %s1799 = smul.u32 16, %s22
          %1801 = vsyncadd %s1792, 0
          %s1802 = smul.addr %s1799, 4
          %s1803 = scalar_lea.hbm %s4, %s1802
          %s1804 = sshll.u32 %s1795, 4
          %s1805 = int_to_ptr.vmem [resolvable:$true] %s1804
          %s1806 = sshll.u32 %s1803, 4
          %s1807 = int_to_ptr.hbm [resolvable:$true] %s1806
          %1812 = dma.vmem_to_hbm [thread:$0]  %s1805, 1024, %s1807, %s1792, 64, 64, 4
        $region48: #{tpu_custom_call.1} parent=35 // pred_fallthru
          _
      $region36: #{tpu_custom_call.1} parent=5 // pred_fallthru
        _
      %p1813 = scmp.le.s32.totalorder 2, %s13
      // Predicated region
      $region49: #{tpu_custom_call.1} parent=5 // pred_check
        %p1814 = pneg %p1813
      $region50: #{tpu_custom_call.1} parent=5 // pred_check_branch
        %1816 = sbr.rel (%p1814) target = $region52
      $region51: #{tpu_custom_call.1} parent=5 // pred_region
        %s1817 = ssub.s32 %s13, 2
        // Predicated region
        $region53: #{tpu_custom_call.1} parent=51 // pred_check
          %p1818 = pneg %p155
        $region54: #{tpu_custom_call.1} parent=51 // pred_check_branch
          %1820 = sbr.rel (%p1818) target = $region56
        $region55: #{tpu_custom_call.1} parent=51 // pred_region
          %s1821 = sand.u32 %s140, 1
          %s1822 = scalar_lea.sflag [#allocation6], %s1821
          %s1823 = sand.u32 %s140, 1
          %s1824 = smul.addr %s1823, 64
          %s1825 = scalar_lea.vmem [#allocation5], %s1824
          %1827 = dma.done %s1822, 1024
        $region56: #{tpu_custom_call.1} parent=51 // pred_fallthru
          _
      $region52: #{tpu_custom_call.1} parent=5 // pred_fallthru
        _
    $region6: #{tpu_custom_call.1} parent=1 // loop_footer
      %s17 = sadd.s32 1, %s13
    $region7: #{tpu_custom_call.1} parent=1 // loop_footer_branch
      %12 = sbr.rel target = $region3
    $region8: #{tpu_custom_call.1} parent=1 // loop_exit
      _
    %1828 = vsyncpa [#allocation6], 1
    %s1829 = scalar_lea.sflag [#allocation6], 1
    %1830 = vsyncpa %s1829, 1

</llo_original>
